<compile_context>
chip_gen: v6e
topology: v6e:2x2x1
jax: 0.10.0
libtpu: 0.0.40
codegen_flags: <defaults>
</compile_context>

<pallas_src>
import functools

import jax
import jax.numpy as jnp
from jax import lax
from jax.experimental import pallas as pl
from jax.experimental.pallas import tpu as pltpu

BN_EPS = 1e-5


def _round_up(a, b):
    return (a + b - 1) // b * b


def _vmem_limit_bytes():
    try:
        cap = pltpu.get_tpu_info().vmem_capacity_bytes
    except Exception:
        cap = 64 * 1024 * 1024
    return int(min(cap // 2, 64 * 1024 * 1024))


_VMEM_LIMIT = _vmem_limit_bytes()
_TILE_VMEM_BUDGET = 12 * 1024 * 1024   # per-grid-step working-set budget (bytes)


# --------------------------------------------------------------------------- #
# Kernel 1: ReLU + in-VMEM im2col + single MXU matmul + per-tile BN partials.  #
# --------------------------------------------------------------------------- #
def conv_stats_kernel(x_ref, w_ref, y_ref, sum_ref, sq_ref, *,
                      k, stride, tile_h, wo_p, ho_valid, wo_valid, need_mask):
    """One (image, H-tile) grid step.

    x_ref:   (1, Hp, Wp, Cin)  bf16  padded NHWC image; the block index is constant
                                     along the H-tile axis -> DMA'd from HBM once per n.
    w_ref:   (Cout, k*k*Cin)   bf16  flattened conv weight, transposed (resident).
    y_ref:   (1, Cout, tile_m) bf16  pre-BN conv output, channel-major (lane-dense).
    sum_ref: (1, 1, Cout, 1)   f32   per-tile per-channel sum of y.
    sq_ref:  (1, 1, Cout, 1)   f32   per-tile per-channel sum of y*y.
    """
    j = pl.program_id(1)
    halo_h = (tile_h - 1) * stride + k
    h0 = j * (tile_h * stride)

    # ReLU on the halo (cheaper than on the k*k-expanded patches). relu(0) == 0, so
    # the zero conv-padding commutes with the activation.  Assemble in f32 so the
    # slice/concat/reshape relayouts stay on the well-trodden (8,128) layout path.
    halo = jnp.maximum(x_ref[0, pl.ds(h0, halo_h), :, :].astype(jnp.float32), 0.0)

    # In-VMEM im2col: k*k shifted views, concatenated along the channel axis.
    taps = []
    for kh in range(k):
        for kw in range(k):
            if stride == 1:
                taps.append(halo[kh:kh + tile_h, kw:kw + wo_p, :])
            else:
                # TODO(synk): stride>1 relies on Mosaic strided value-slice lowering.
                taps.append(halo[kh:kh + (tile_h - 1) * stride + 1:stride,
                                 kw:kw + (wo_p - 1) * stride + 1:stride, :])
    patches = jnp.concatenate(taps, axis=-1)              # (tile_h, wo_p, k*k*Cin)
    tile_m = tile_h * wo_p
    # wo_p is a multiple of 8, minor dim unchanged -> layout-trivial collapse.
    patches = patches.reshape(tile_m, patches.shape[-1])
    patches = patches.astype(jnp.bfloat16)                # bf16 MXU feed

    # Single MXU pass, NT orientation: (Cout, K) x (tile_m, K)^T -> (Cout, tile_m).
    # Channel-major result => unmasked lane-dense stores and NCHW falls out of phase 2.
    y = lax.dot_general(w_ref[...], patches,
                        dimension_numbers=(((1,), (1,)), ((), ())),
                        preferred_element_type=jnp.float32)   # (Cout, tile_m) f32
    y_ref[0] = y.astype(y_ref.dtype)

    if need_mask:
        # Spatially padded output positions may see real pixels -> exclude from stats.
        pos = lax.broadcasted_iota(jnp.int32, (1, tile_m), 1)
        ho = j * tile_h + pos // wo_p
        wo = pos % wo_p
        valid = jnp.logical_and(ho < ho_valid, wo < wo_valid)
        y = jnp.where(valid, y, 0.0)

    # BN statistics from the f32 accumulator (before the bf16 cast); lane reductions.
    sum_ref[0, 0] = jnp.sum(y, axis=1, keepdims=True)      # (Cout, 1)
    sq_ref[0, 0] = jnp.sum(y * y, axis=1, keepdims=True)   # (Cout, 1)


# --------------------------------------------------------------------------- #
# Kernel 2: apply folded BatchNorm (y * scale + shift), channel-major tiles.   #
# --------------------------------------------------------------------------- #
def bn_apply_kernel(y_ref, scale_ref, shift_ref, out_ref):
    y = y_ref[0].astype(jnp.float32)                       # (Cout, tile_m)
    out_ref[0] = (y * scale_ref[...] + shift_ref[...]).astype(out_ref.dtype)


# --------------------------------------------------------------------------- #
# Wrapper                                                                      #
# --------------------------------------------------------------------------- #
@functools.partial(jax.jit, static_argnames=("stride", "padding"))
def stdconv_forward(x_nchw, weight_oihw, gamma, beta, *, stride, padding):
    """StdConv forward:  BN(Conv2d(ReLU(x)))  with training-mode batch statistics."""
    n, c_in, h, w = x_nchw.shape
    c_out, _, k, _ = weight_oihw.shape
    kdim = k * k * c_in

    ho = (h + 2 * padding - k) // stride + 1
    wo = (w + 2 * padding - k) // stride + 1

    # ---- tile geometry -------------------------------------------------------
    wo_p = _round_up(wo, 8)   # sublane-aligned so the in-kernel collapse is trivial

    def step_bytes(th):
        tm = th * wo_p
        return (tm * kdim * 4          # f32 patch matrix (assembly working set)
                + c_out * tm * 4       # f32 matmul result
                + 2 * 2 * c_out * tm)  # double-buffered bf16 y block

    tile_h = ho
    if step_bytes(tile_h) > _TILE_VMEM_BUDGET:
        cands = [t for t in range(ho - 1, 0, -1)
                 if (t * wo_p) % 128 == 0 and step_bytes(t) <= _TILE_VMEM_BUDGET]
        if cands:
            tile_h = cands[0]
    ho_p = _round_up(ho, tile_h)
    num_h_tiles = ho_p // tile_h
    tile_m = tile_h * wo_p
    hw_p = ho_p * wo_p
    need_mask = (ho_p != ho) or (wo_p != wo)

    # ---- padded NHWC bf16 input (transpose + pad + cast fuse into one XLA pass) ----
    hp = max(h + 2 * padding, (ho_p - 1) * stride + k)
    wp = max(w + 2 * padding, (wo_p - 1) * stride + k)
    x = jnp.transpose(x_nchw, (0, 2, 3, 1))
    x = jnp.pad(x, ((0, 0), (padding, hp - h - padding),
                    (padding, wp - w - padding), (0, 0)))
    x = x.astype(jnp.bfloat16)

    # (Cout, k*k*Cin), column order (kh, kw, ci), pre-cast to bf16 (MXU feed).
    wmat_t = jnp.transpose(weight_oihw, (0, 2, 3, 1)).reshape(c_out, kdim)
    wmat_t = wmat_t.astype(jnp.bfloat16)

    cparams = pltpu.CompilerParams(
        dimension_semantics=("parallel", "parallel"),
        vmem_limit_bytes=_VMEM_LIMIT,
    )

    kern = functools.partial(
        conv_stats_kernel, k=k, stride=stride, tile_h=tile_h, wo_p=wo_p,
        ho_valid=ho, wo_valid=wo, need_mask=need_mask)

    # ---- phase 1: ReLU + conv + partial BN statistics -------------------------
    y, sums, sqs = pl.pallas_call(
        kern,
        out_shape=(
            jax.ShapeDtypeStruct((n, c_out, hw_p), jnp.bfloat16),
            jax.ShapeDtypeStruct((n, num_h_tiles, c_out, 1), jnp.float32),
            jax.ShapeDtypeStruct((n, num_h_tiles, c_out, 1), jnp.float32),
        ),
        grid=(n, num_h_tiles),
        in_specs=[
            pl.BlockSpec((1, hp, wp, c_in), lambda b, j: (b, 0, 0, 0)),
            pl.BlockSpec((c_out, kdim), lambda b, j: (0, 0)),
        ],
        out_specs=(
            pl.BlockSpec((1, c_out, tile_m), lambda b, j: (b, 0, j)),
            pl.BlockSpec((1, 1, c_out, 1), lambda b, j: (b, j, 0, 0)),
            pl.BlockSpec((1, 1, c_out, 1), lambda b, j: (b, j, 0, 0)),
        ),
        compiler_params=cparams,
    )(x, wmat_t)

    # ---- tiny epilogue: fold BN into per-channel scale / shift ----------------
    count = n * ho * wo
    total_sum = jnp.sum(sums, axis=(0, 1))[:, 0]            # (Cout,)
    total_sq = jnp.sum(sqs, axis=(0, 1))[:, 0]              # (Cout,)
    mean = total_sum / count
    var = jnp.maximum(total_sq / count - mean * mean, 0.0)  # biased, one-pass
    scale = gamma * lax.rsqrt(var + BN_EPS)
    shift = beta - mean * scale

    # ---- phase 2: apply the normalization; output is already channel-major ----
    out = pl.pallas_call(
        bn_apply_kernel,
        out_shape=jax.ShapeDtypeStruct((n, c_out, hw_p), jnp.float32),
        grid=(n, num_h_tiles),
        in_specs=[
            pl.BlockSpec((1, c_out, tile_m), lambda b, j: (b, 0, j)),
            pl.BlockSpec((c_out, 1), lambda b, j: (0, 0)),
            pl.BlockSpec((c_out, 1), lambda b, j: (0, 0)),
        ],
        out_specs=pl.BlockSpec((1, c_out, tile_m), lambda b, j: (b, 0, j)),
        compiler_params=cparams,
    )(y, scale.reshape(c_out, 1), shift.reshape(c_out, 1))

    out = out.reshape(n, c_out, ho_p, wo_p)                 # NCHW (metadata only)
    if need_mask:
        out = out[:, :, :ho, :wo]
    return out

    # TODO(synk): BatchNorm running_mean/running_var buffer updates (training-time
    # side effect) are not modeled; they do not affect the forward output.


# --------------------------------------------------------------------------- #
# Pure-JAX reference (for a correctness sanity check in the demo).             #
# --------------------------------------------------------------------------- #
def stdconv_reference(x_nchw, weight_oihw, gamma, beta, *, stride, padding):
    x = jnp.maximum(x_nchw, 0.0)
    y = lax.conv_general_dilated(
        x, weight_oihw, window_strides=(stride, stride),
        padding=[(padding, padding), (padding, padding)],
        dimension_numbers=("NCHW", "OIHW", "NCHW"))
    mean = jnp.mean(y, axis=(0, 2, 3), keepdims=True)
    var = jnp.mean((y - mean) ** 2, axis=(0, 2, 3), keepdims=True)
    y_hat = (y - mean) * lax.rsqrt(var + BN_EPS)
    return y_hat * gamma.reshape(1, -1, 1, 1) + beta.reshape(1, -1, 1, 1)


if __name__ == "__main__":
    # StdConv(C_in=16, C_out=32, kernel_size=3, stride=1, padding=1, affine=True)
    N, C_IN, C_OUT, H, W = 4, 16, 32, 16, 16
    K, STRIDE, PADDING = 3, 1, 1

    key = jax.random.PRNGKey(0)
    kx, kwt, kg, kb = jax.random.split(key, 4)
    x = jax.random.normal(kx, (N, C_IN, H, W), jnp.float32)              # NCHW
    weight = 0.3 * jax.random.normal(kwt, (C_OUT, C_IN, K, K), jnp.float32)
    gamma = 1.0 + 0.1 * jax.random.normal(kg, (C_OUT,), jnp.float32)
    beta = 0.1 * jax.random.normal(kb, (C_OUT,), jnp.float32)

    y = stdconv_forward(x, weight, gamma, beta, stride=STRIDE, padding=PADDING)
    jax.block_until_ready(y)

    expected_shape = (N, C_OUT,
                      (H + 2 * PADDING - K) // STRIDE + 1,
                      (W + 2 * PADDING - K) // STRIDE + 1)
    assert y.shape == expected_shape, (y.shape, expected_shape)

    y_ref = stdconv_reference(x, weight, gamma, beta, stride=STRIDE, padding=PADDING)
    max_err = float(jnp.max(jnp.abs(y - y_ref)))
    assert bool(jnp.all(jnp.isfinite(y)))
    assert max_err < 5e-2, f"max abs error vs reference too large: {max_err}"

    print("KERNEL_OK")
</pallas_src>

<mosaic_0001>
module attributes {stable_mosaic.version = 11 : i64} {
  func.func @conv_stats_kernel(%arg0: i32, %arg1: i32, %arg2: memref<1x18x18x16xbf16, #tpu.memory_space<vmem>>, %arg3: memref<32x144xbf16, #tpu.memory_space<vmem>>, %arg4: memref<1x32x256xbf16, #tpu.memory_space<vmem>>, %arg5: memref<1x1x32x1xf32, #tpu.memory_space<vmem>>, %arg6: memref<1x1x32x1xf32, #tpu.memory_space<vmem>>) attributes {dimension_semantics = [#tpu.dimension_semantics<parallel>, #tpu.dimension_semantics<parallel>], iteration_bounds = array<i64: 4, 1>, scalar_prefetch = 0 : i64, scratch_operands = 0 : i64, tpu.core_type = #tpu.core_type<tc>, window_params = [{transform_indices = @transform_0, window_bounds = array<i64: 1, 18, 18, 16>}, {pipeline_mode = #tpu.pipeline_mode<synchronous>, transform_indices = @transform_1, window_bounds = array<i64: 32, 144>}, {transform_indices = @transform_2, window_bounds = array<i64: 1, 32, 256>}, {transform_indices = @transform_3, window_bounds = array<i64: 1, 1, 32, 1>}, {transform_indices = @transform_4, window_bounds = array<i64: 1, 1, 32, 1>}]} {
    %c16_i32 = arith.constant 16 : i32
    %0 = arith.muli %arg1, %c16_i32 : i32
    %c0 = arith.constant 0 : index
    %1 = arith.index_cast %0 : i32 to index
    %c0_0 = arith.constant 0 : index
    %c0_1 = arith.constant 0 : index
    %2 = vector.load %arg2[%c0, %1, %c0_0, %c0_1] : memref<1x18x18x16xbf16, #tpu.memory_space<vmem>>, vector<1x18x18x16xbf16>
    %3 = vector.shape_cast %2 : vector<1x18x18x16xbf16> to vector<18x18x16xbf16>
    %4 = arith.extf %3 : vector<18x18x16xbf16> to vector<18x18x16xf32>
    %cst = arith.constant 0.000000e+00 : f32
    %5 = vector.broadcast %cst : f32 to vector<18x18x16xf32>
    %6 = arith.maximumf %4, %5 : vector<18x18x16xf32>
    %7 = vector.extract_strided_slice %6 {offsets = [0, 0, 0], sizes = [16, 16, 16], strides = [1, 1, 1]} : vector<18x18x16xf32> to vector<16x16x16xf32>
    %8 = vector.extract_strided_slice %6 {offsets = [0, 1, 0], sizes = [16, 16, 16], strides = [1, 1, 1]} : vector<18x18x16xf32> to vector<16x16x16xf32>
    %9 = vector.extract_strided_slice %6 {offsets = [0, 2, 0], sizes = [16, 16, 16], strides = [1, 1, 1]} : vector<18x18x16xf32> to vector<16x16x16xf32>
    %10 = vector.extract_strided_slice %6 {offsets = [1, 0, 0], sizes = [16, 16, 16], strides = [1, 1, 1]} : vector<18x18x16xf32> to vector<16x16x16xf32>
    %11 = vector.extract_strided_slice %6 {offsets = [1, 1, 0], sizes = [16, 16, 16], strides = [1, 1, 1]} : vector<18x18x16xf32> to vector<16x16x16xf32>
    %12 = vector.extract_strided_slice %6 {offsets = [1, 2, 0], sizes = [16, 16, 16], strides = [1, 1, 1]} : vector<18x18x16xf32> to vector<16x16x16xf32>
    %13 = vector.extract_strided_slice %6 {offsets = [2, 0, 0], sizes = [16, 16, 16], strides = [1, 1, 1]} : vector<18x18x16xf32> to vector<16x16x16xf32>
    %14 = vector.extract_strided_slice %6 {offsets = [2, 1, 0], sizes = [16, 16, 16], strides = [1, 1, 1]} : vector<18x18x16xf32> to vector<16x16x16xf32>
    %15 = vector.extract_strided_slice %6 {offsets = [2, 2, 0], sizes = [16, 16, 16], strides = [1, 1, 1]} : vector<18x18x16xf32> to vector<16x16x16xf32>
    %16 = tpu.concatenate %7, %8, %9, %10, %11, %12, %13, %14, %15 in 2 : vector<16x16x16xf32>, vector<16x16x16xf32>, vector<16x16x16xf32>, vector<16x16x16xf32>, vector<16x16x16xf32>, vector<16x16x16xf32>, vector<16x16x16xf32>, vector<16x16x16xf32>, vector<16x16x16xf32> -> vector<16x16x144xf32>
    %17 = vector.shape_cast %16 : vector<16x16x144xf32> to vector<256x144xf32>
    %18 = arith.truncf %17 : vector<256x144xf32> to vector<256x144xbf16>
    %c0_2 = arith.constant 0 : index
    %c0_3 = arith.constant 0 : index
    %19 = vector.load %arg3[%c0_2, %c0_3] : memref<32x144xbf16, #tpu.memory_space<vmem>>, vector<32x144xbf16>
    %cst_4 = arith.constant dense<0.000000e+00> : vector<32x256xf32>
    %20 = tpu.matmul %19, %18, %cst_4 {dimension_numbers = #tpu.dot_dimension_numbers<[1], [1], [0], [0], [0, 0, 1, 0], [], []>} : vector<32x144xbf16>, vector<256x144xbf16>, vector<32x256xf32> -> vector<32x256xf32>
    %21 = arith.truncf %20 : vector<32x256xf32> to vector<32x256xbf16>
    %c0_5 = arith.constant 0 : index
    %c0_6 = arith.constant 0 : index
    %c0_7 = arith.constant 0 : index
    %22 = vector.load %arg4[%c0_5, %c0_6, %c0_7] : memref<1x32x256xbf16, #tpu.memory_space<vmem>>, vector<1x32x256xbf16>
    %23 = vector.shape_cast %22 : vector<1x32x256xbf16> to vector<32x256xbf16>
    %24 = vector.shape_cast %21 : vector<32x256xbf16> to vector<1x32x256xbf16>
    tpu.vector_store %arg4[%c0_5, %c0_6, %c0_7], %24 {strides = array<i32>} : memref<1x32x256xbf16, #tpu.memory_space<vmem>>, vector<1x32x256xbf16>,
    %cst_8 = arith.constant dense<0.000000e+00> : vector<32xf32>
    %25 = vector.multi_reduction <add>, %20, %cst_8 [1] : vector<32x256xf32> to vector<32xf32>
    %26 = vector.shape_cast %25 : vector<32xf32> to vector<32x1xf32>
    %c0_9 = arith.constant 0 : index
    %c0_10 = arith.constant 0 : index
    %c0_11 = arith.constant 0 : index
    %c0_12 = arith.constant 0 : index
    %27 = vector.load %arg5[%c0_9, %c0_10, %c0_11, %c0_12] : memref<1x1x32x1xf32, #tpu.memory_space<vmem>>, vector<1x1x32x1xf32>
    %28 = vector.shape_cast %27 : vector<1x1x32x1xf32> to vector<32x1xf32>
    %29 = vector.shape_cast %26 : vector<32x1xf32> to vector<1x1x32x1xf32>
    tpu.vector_store %arg5[%c0_9, %c0_10, %c0_11, %c0_12], %29 {strides = array<i32>} : memref<1x1x32x1xf32, #tpu.memory_space<vmem>>, vector<1x1x32x1xf32>,
    %30 = arith.mulf %20, %20 : vector<32x256xf32>
    %cst_13 = arith.constant dense<0.000000e+00> : vector<32xf32>
    %31 = vector.multi_reduction <add>, %30, %cst_13 [1] : vector<32x256xf32> to vector<32xf32>
    %32 = vector.shape_cast %31 : vector<32xf32> to vector<32x1xf32>
    %c0_14 = arith.constant 0 : index
    %c0_15 = arith.constant 0 : index
    %c0_16 = arith.constant 0 : index
    %c0_17 = arith.constant 0 : index
    %33 = vector.load %arg6[%c0_14, %c0_15, %c0_16, %c0_17] : memref<1x1x32x1xf32, #tpu.memory_space<vmem>>, vector<1x1x32x1xf32>
    %34 = vector.shape_cast %33 : vector<1x1x32x1xf32> to vector<32x1xf32>
    %35 = vector.shape_cast %32 : vector<32x1xf32> to vector<1x1x32x1xf32>
    tpu.vector_store %arg6[%c0_14, %c0_15, %c0_16, %c0_17], %35 {strides = array<i32>} : memref<1x1x32x1xf32, #tpu.memory_space<vmem>>, vector<1x1x32x1xf32>,
    return
  }
  func.func @transform_0(%arg0: i32, %arg1: i32) -> (i32, i32, i32, i32) {
    %c0_i32 = arith.constant 0 : i32
    %c0_i32_0 = arith.constant 0 : i32
    %c0_i32_1 = arith.constant 0 : i32
    %c0_i32_2 = arith.constant 0 : i32
    return %arg0, %c0_i32, %c0_i32_0, %c0_i32_1 : i32, i32, i32, i32
  }
  func.func @transform_1(%arg0: i32, %arg1: i32) -> (i32, i32) {
    %c0_i32 = arith.constant 0 : i32
    %c0_i32_0 = arith.constant 0 : i32
    %c0_i32_1 = arith.constant 0 : i32
    return %c0_i32, %c0_i32_0 : i32, i32
  }
  func.func @transform_2(%arg0: i32, %arg1: i32) -> (i32, i32, i32) {
    %c0_i32 = arith.constant 0 : i32
    %c0_i32_0 = arith.constant 0 : i32
    return %arg0, %c0_i32, %arg1 : i32, i32, i32
  }
  func.func @transform_3(%arg0: i32, %arg1: i32) -> (i32, i32, i32, i32) {
    %c0_i32 = arith.constant 0 : i32
    %c0_i32_0 = arith.constant 0 : i32
    %c0_i32_1 = arith.constant 0 : i32
    return %arg0, %arg1, %c0_i32, %c0_i32_0 : i32, i32, i32, i32
  }
  func.func @transform_4(%arg0: i32, %arg1: i32) -> (i32, i32, i32, i32) {
    %c0_i32 = arith.constant 0 : i32
    %c0_i32_0 = arith.constant 0 : i32
    %c0_i32_1 = arith.constant 0 : i32
    return %arg0, %arg1, %c0_i32, %c0_i32_0 : i32, i32, i32, i32
  }
}

module attributes {stable_mosaic.version = 11 : i64} {
  func.func @bn_apply_kernel(%arg0: i32, %arg1: i32, %arg2: memref<1x32x256xbf16, #tpu.memory_space<vmem>>, %arg3: memref<32x1xf32, #tpu.memory_space<vmem>>, %arg4: memref<32x1xf32, #tpu.memory_space<vmem>>, %arg5: memref<1x32x256xf32, #tpu.memory_space<vmem>>) attributes {dimension_semantics = [#tpu.dimension_semantics<parallel>, #tpu.dimension_semantics<parallel>], iteration_bounds = array<i64: 4, 1>, scalar_prefetch = 0 : i64, scratch_operands = 0 : i64, tpu.core_type = #tpu.core_type<tc>, window_params = [{transform_indices = @transform_0, window_bounds = array<i64: 1, 32, 256>}, {pipeline_mode = #tpu.pipeline_mode<synchronous>, transform_indices = @transform_1, window_bounds = array<i64: 32, 1>}, {pipeline_mode = #tpu.pipeline_mode<synchronous>, transform_indices = @transform_2, window_bounds = array<i64: 32, 1>}, {transform_indices = @transform_3, window_bounds = array<i64: 1, 32, 256>}]} {
    %c0 = arith.constant 0 : index
    %c0_0 = arith.constant 0 : index
    %c0_1 = arith.constant 0 : index
    %0 = vector.load %arg2[%c0, %c0_0, %c0_1] : memref<1x32x256xbf16, #tpu.memory_space<vmem>>, vector<1x32x256xbf16>
    %1 = vector.shape_cast %0 : vector<1x32x256xbf16> to vector<32x256xbf16>
    %2 = arith.extf %1 : vector<32x256xbf16> to vector<32x256xf32>
    %c0_2 = arith.constant 0 : index
    %c0_3 = arith.constant 0 : index
    %3 = vector.load %arg3[%c0_2, %c0_3] : memref<32x1xf32, #tpu.memory_space<vmem>>, vector<32x1xf32>
    %4 = vector.broadcast %3 : vector<32x1xf32> to vector<32x256xf32>
    %5 = arith.mulf %2, %4 : vector<32x256xf32>
    %c0_4 = arith.constant 0 : index
    %c0_5 = arith.constant 0 : index
    %6 = vector.load %arg4[%c0_4, %c0_5] : memref<32x1xf32, #tpu.memory_space<vmem>>, vector<32x1xf32>
    %7 = vector.broadcast %6 : vector<32x1xf32> to vector<32x256xf32>
    %8 = arith.addf %5, %7 : vector<32x256xf32>
    %c0_6 = arith.constant 0 : index
    %c0_7 = arith.constant 0 : index
    %c0_8 = arith.constant 0 : index
    %9 = vector.load %arg5[%c0_6, %c0_7, %c0_8] : memref<1x32x256xf32, #tpu.memory_space<vmem>>, vector<1x32x256xf32>
    %10 = vector.shape_cast %9 : vector<1x32x256xf32> to vector<32x256xf32>
    %11 = vector.shape_cast %8 : vector<32x256xf32> to vector<1x32x256xf32>
    tpu.vector_store %arg5[%c0_6, %c0_7, %c0_8], %11 {strides = array<i32>} : memref<1x32x256xf32, #tpu.memory_space<vmem>>, vector<1x32x256xf32>,
    return
  }
  func.func @transform_0(%arg0: i32, %arg1: i32) -> (i32, i32, i32) {
    %c0_i32 = arith.constant 0 : i32
    %c0_i32_0 = arith.constant 0 : i32
    return %arg0, %c0_i32, %arg1 : i32, i32, i32
  }
  func.func @transform_1(%arg0: i32, %arg1: i32) -> (i32, i32) {
    %c0_i32 = arith.constant 0 : i32
    %c0_i32_0 = arith.constant 0 : i32
    %c0_i32_1 = arith.constant 0 : i32
    return %c0_i32, %c0_i32_0 : i32, i32
  }
  func.func @transform_2(%arg0: i32, %arg1: i32) -> (i32, i32) {
    %c0_i32 = arith.constant 0 : i32
    %c0_i32_0 = arith.constant 0 : i32
    %c0_i32_1 = arith.constant 0 : i32
    return %c0_i32, %c0_i32_0 : i32, i32
  }
  func.func @transform_3(%arg0: i32, %arg1: i32) -> (i32, i32, i32) {
    %c0_i32 = arith.constant 0 : i32
    %c0_i32_0 = arith.constant 0 : i32
    return %arg0, %c0_i32, %arg1 : i32, i32, i32
  }
}

</mosaic_0001>

<llo_original>
// kernel: stdconv_forward.3
$region0: #{stdconv_forward.3}
  #allocation0 [shape = 'u32[]', space=smem, size = 0x4, offset = 0x4, fixed_abs, tag = 'smem constant byte address 0x4 - core index']
  #allocation1 [shape = 'u32[144,128]{1,0:T(1,128)}', space=vmem, size = 0x12000, scoped, tag = 'internal scratch']
  %s0 = inlined_call_operand.vmem [shape: bf16[4,32,256], index: 0, kind: input, shape index: {}]
  %s1 = inlined_call_operand.vmem [shape: f32[32,1], index: 1, kind: input, shape index: {}]
  %s2 = inlined_call_operand.vmem [shape: f32[32,1], index: 2, kind: input, shape index: {}]
  %s3 = inlined_call_operand.vmem [shape: f32[4,32,256], index: 3, kind: output, shape index: {}]
  %s4 = sld [smem:[#allocation0]]
  $region45: #{stdconv_forward.3} parent=0
    _
  %s6 = ssub.s32 1, %s4
  %s7 = scalar_select 0, %s6, %s4
  loop: start=0, step=1, limit=6
  $region2: #{stdconv_forward.3} parent=0 // loop_pre_header
    _
  $region3: #{stdconv_forward.3} parent=0 // loop_header
    %s9 = sphi 0, %s13
    %p10 = scmp.ge.s32.totalorder %s9, 6
    %s16 = sphi 0, %s28
    %s17 = sphi 0, %s24
    %s18 = sphi 0, %s16
    %s19 = sphi 0, %s17
    %s20 = sphi 0, %s18
    %s21 = sphi 0, %s19
    %s33 = sphi 0, %s35
    %s36 = sphi 0, %s33
    %s37 = sphi 0, %s36
    %s53 = sphi 0, %s37
    %s57 = sphi 0, %s57
    %s59 = sphi 0, %s57
    %s60 = sphi 0, %s59
    %s74 = sphi 0, %s60
    %s78 = sphi 0, %s78
    %s80 = sphi 0, %s78
    %s81 = sphi 0, %s80
    %s95 = sphi 0, %s81
    %s103 = sphi 0, %s105
    %s106 = sphi 0, %s103
    %s107 = sphi 0, %s106
    %s123 = sphi 0, %s107
  $region4: #{stdconv_forward.3} parent=0 // loop_header_branch
    %12 = sbr.rel (%p10) target = $region8
  $region5: #{stdconv_forward.3} parent=0 // loop_body
    %s14 = ssub.s32 %s9, 1
    %s15 = ssub.s32 %s9, 2
    %s22 = sadd.s32 1, %s17
    %p23 = scmp.ge.s32.totalorder %s22, 1
    %s24 = scalar_select %p23, 0, %s22
    %s25 = sadd.s32 1, %s16
    %s26 = scalar_select %p23, %s25, %s16
    %p27 = scmp.ge.s32.totalorder %s26, 4
    %s28 = scalar_select %p27, 0, %s26
    %s29 = ssub.s32 %s16, %s28
    %s30 = ssub.s32 %s17, %s24
    %s31 = sor.u32 %s29, %s30
    %p32 = scmp.eq.s32.totalorder %s31, 0
    %s34 = sadd.s32 %s33, 1
    %s35 = scalar_select %p32, %s33, %s34
    %p38 = pneg %p32
    %p39 = scmp.eq.s32.totalorder %s9, 3
    %p40 = por %p38, %p39
    %p41 = scmp.ne.s32.totalorder %s33, %s36
    %p42 = scmp.eq.s32.totalorder %s9, 0
    %p43 = por %p41, %p42
    %p44 = scmp.ne.s32.totalorder %s33, %s36
    %p45 = scmp.eq.s32.totalorder %s14, 3
    %p46 = por %p44, %p45
    %p47 = scmp.ne.s32.totalorder %s36, %s37
    %p48 = scmp.eq.s32.totalorder %s14, 0
    %p49 = por %p47, %p48
    %p50 = scmp.ne.s32.totalorder %s36, %s37
    %p51 = scmp.eq.s32.totalorder %s15, 3
    %p52 = por %p50, %p51
    %p54 = scmp.ne.s32.totalorder %s37, %s53
    %p55 = scmp.eq.s32.totalorder %s15, 0
    %p56 = por %p54, %p55
    %s58 = sadd.s32 %s57, 1
    %p61 = scmp.eq.s32.totalorder %s9, 3
    %p62 = scmp.ne.s32.totalorder %s57, %s59
    %p63 = scmp.eq.s32.totalorder %s9, 0
    %p64 = por %p62, %p63
    %p65 = scmp.ne.s32.totalorder %s57, %s59
    %p66 = scmp.eq.s32.totalorder %s14, 3
    %p67 = por %p65, %p66
    %p68 = scmp.ne.s32.totalorder %s59, %s60
    %p69 = scmp.eq.s32.totalorder %s14, 0
    %p70 = por %p68, %p69
    %p71 = scmp.ne.s32.totalorder %s59, %s60
    %p72 = scmp.eq.s32.totalorder %s15, 3
    %p73 = por %p71, %p72
    %p75 = scmp.ne.s32.totalorder %s60, %s74
    %p76 = scmp.eq.s32.totalorder %s15, 0
    %p77 = por %p75, %p76
    %s79 = sadd.s32 %s78, 1
    %p82 = scmp.eq.s32.totalorder %s9, 3
    %p83 = scmp.ne.s32.totalorder %s78, %s80
    %p84 = scmp.eq.s32.totalorder %s9, 0
    %p85 = por %p83, %p84
    %p86 = scmp.ne.s32.totalorder %s78, %s80
    %p87 = scmp.eq.s32.totalorder %s14, 3
    %p88 = por %p86, %p87
    %p89 = scmp.ne.s32.totalorder %s80, %s81
    %p90 = scmp.eq.s32.totalorder %s14, 0
    %p91 = por %p89, %p90
    %p92 = scmp.ne.s32.totalorder %s80, %s81
    %p93 = scmp.eq.s32.totalorder %s15, 3
    %p94 = por %p92, %p93
    %p96 = scmp.ne.s32.totalorder %s81, %s95
    %p97 = scmp.eq.s32.totalorder %s15, 0
    %p98 = por %p96, %p97
    %s99 = ssub.s32 %s16, %s28
    %s100 = ssub.s32 %s17, %s24
    %s101 = sor.u32 %s99, %s100
    %p102 = scmp.eq.s32.totalorder %s101, 0
    %s104 = sadd.s32 %s103, 1
    %s105 = scalar_select %p102, %s103, %s104
    %p108 = pneg %p102
    %p109 = scmp.eq.s32.totalorder %s9, 3
    %p110 = por %p108, %p109
    %p111 = scmp.ne.s32.totalorder %s103, %s106
    %p112 = scmp.eq.s32.totalorder %s9, 0
    %p113 = por %p111, %p112
    %p114 = scmp.ne.s32.totalorder %s103, %s106
    %p115 = scmp.eq.s32.totalorder %s14, 3
    %p116 = por %p114, %p115
    %p117 = scmp.ne.s32.totalorder %s106, %s107
    %p118 = scmp.eq.s32.totalorder %s14, 0
    %p119 = por %p117, %p118
    %p120 = scmp.ne.s32.totalorder %s106, %s107
    %p121 = scmp.eq.s32.totalorder %s15, 3
    %p122 = por %p120, %p121
    %p124 = scmp.ne.s32.totalorder %s107, %s123
    %p125 = scmp.eq.s32.totalorder %s15, 0
    %p126 = por %p124, %p125
    %p127 = scmp.le.s32.totalorder 1, %s9
    %p128 = scmp.lt.s32.totalorder %s9, 5
    %p129 = pnand %p127, %p128
    %p130 = pneg %p129
    // Predicated region
    $region9: #{stdconv_forward.3} parent=5 // pred_check
      _
    $region10: #{stdconv_forward.3} parent=5 // pred_check_branch
      %132 = sbr.rel (%p129) target = $region12
    $region11: #{stdconv_forward.3} parent=5 // pred_region
      %s133 = ssub.s32 %s9, 1
      // Predicated region
      $region13: #{stdconv_forward.3} parent=11 // pred_check
        %p134 = pneg %p70
      $region14: #{stdconv_forward.3} parent=11 // pred_check_branch
        %136 = sbr.rel (%p134) target = $region16
      $region15: #{stdconv_forward.3} parent=11 // pred_region
        _
      $region16: #{stdconv_forward.3} parent=11 // pred_fallthru
        _
      // Predicated region
      $region17: #{stdconv_forward.3} parent=11 // pred_check
        %p137 = pneg %p91
      $region18: #{stdconv_forward.3} parent=11 // pred_check_branch
        %139 = sbr.rel (%p137) target = $region20
      $region19: #{stdconv_forward.3} parent=11 // pred_region
        _
      $region20: #{stdconv_forward.3} parent=11 // pred_fallthru
        _
    $region12: #{stdconv_forward.3} parent=5 // pred_fallthru
      _
    %p140 = scmp.lt.s32.totalorder %s9, 4
    // Predicated region
    $region21: #{stdconv_forward.3} parent=5 // pred_check
      %p141 = pneg %p140
    $region22: #{stdconv_forward.3} parent=5 // pred_check_branch
      %143 = sbr.rel (%p141) target = $region24
    $region23: #{stdconv_forward.3} parent=5 // pred_region
      // Predicated region
      $region25: #{stdconv_forward.3} parent=23 // pred_check
        %p144 = pneg %p43
      $region26: #{stdconv_forward.3} parent=23 // pred_check_branch
        %146 = sbr.rel (%p144) target = $region28
      $region27: #{stdconv_forward.3} parent=23 // pred_region
        %s147 = smul.u32 2, %s17
        %p148 = scmp.lt.s32.totalorder %s16, 3
        %s149 = scalar_select %p148, %s16, 3
        %p150 = scmp.lt.s32.totalorder %s147, 1
        %s151 = scalar_select %p150, %s147, 1
        %s152 = smul.addr %s149, 8
        %s153 = sadd.s32 %s151, %s152
        %s154 = smul.addr %s153, 4
        %s155 = scalar_lea.vmem %s0, %s154
        %s156 = smul.u32 2, %s17
      $region28: #{stdconv_forward.3} parent=23 // pred_fallthru
        _
    $region24: #{stdconv_forward.3} parent=5 // pred_fallthru
      _
    %p157 = scmp.le.s32.totalorder 1, %s9
    %p158 = scmp.lt.s32.totalorder %s9, 5
    %p159 = pnand %p157, %p158
    %p160 = pneg %p159
    // Predicated region
    $region29: #{stdconv_forward.3} parent=5 // pred_check
      _
    $region30: #{stdconv_forward.3} parent=5 // pred_check_branch
      %162 = sbr.rel (%p159) target = $region32
    $region31: #{stdconv_forward.3} parent=5 // pred_region
      %s163 = ssub.s32 %s9, 1
      %s164 = smul.u32 2, %s19
      %p165 = scmp.lt.s32.totalorder %s18, 3
      %s166 = scalar_select %p165, %s18, 3
      %p167 = scmp.lt.s32.totalorder %s164, 1
      %s168 = scalar_select %p167, %s164, 1
      %s169 = smul.addr %s166, 8
      %s170 = sadd.s32 %s168, %s169
      %s171 = smul.addr %s170, 4
      %s172 = scalar_lea.vmem %s0, %s171
      %p173 = pneg %p49
      %p174 = pneg %p46
      %p175 = pneg %p70
      %p176 = pneg %p67
      %p177 = pneg %p91
      %p178 = pneg %p88
      %p179 = pneg %p119
      %p180 = pneg %p116
      %s181 = smul.u32 2, %s19
      %p182 = scmp.lt.s32.totalorder %s18, 3
      %s183 = scalar_select %p182, %s18, 3
      %p184 = scmp.lt.s32.totalorder %s181, 1
      %s185 = scalar_select %p184, %s181, 1
      %s186 = smul.addr %s183, 8
      %s187 = sadd.s32 %s185, %s186
      %s188 = smul.addr %s187, 8
      %s189 = scalar_lea.vmem %s3, %s188
      %s190 = smul.u32 2, %s19
      %p191 = scmp.lt.s32.totalorder %s18, 3
      %s192 = scalar_select %p191, %s18, 3
      %p193 = scmp.lt.s32.totalorder %s190, 1
      %s194 = scalar_select %p193, %s190, 1
      %s195 = smul.addr %s192, 8
      %s196 = sadd.s32 %s194, %s195
      %s197 = smul.addr %s196, 4
      %s198 = scalar_lea.vmem %s0, %s197
      %s199 = smul.u32 2, %s19
      %s200 = smul.u32 2, %s19
      %p201 = scmp.lt.s32.totalorder %s18, 3
      %s202 = scalar_select %p201, %s18, 3
      %p203 = scmp.lt.s32.totalorder %s200, 1
      %s204 = scalar_select %p203, %s200, 1
      %s205 = smul.addr %s202, 8
      %s206 = sadd.s32 %s204, %s205
      %s207 = smul.addr %s206, 8
      %s208 = scalar_lea.vmem %s3, %s207
      %s209 = smul.u32 2, %s19
      %v210 = vld [vmem:[%s198] sm:$0xff]
      %v211 = vld [vmem:[%s198 + $0x8] sm:$0xff]
      %v212 = vld [vmem:[%s198 + $0x10] sm:$0xff]
      %v213 = vld [vmem:[%s198 + $0x18] sm:$0xff]
      %v214 = vunpack.c.l.bf16 %v210
      %v215 = vunpack.c.h.bf16 %v210
      %v216 = vunpack.c.l.bf16 %v211
      %v217 = vunpack.c.h.bf16 %v211
      %v218 = vunpack.c.l.bf16 %v212
      %v219 = vunpack.c.h.bf16 %v212
      %v220 = vunpack.c.l.bf16 %v213
      %v221 = vunpack.c.h.bf16 %v213
      %v222 = vld [vmem:[%s1] sm:$0xff]
      %v223 = vld [vmem:[%s1 + $0x8] sm:$0xff]
      %v224 = vld [vmem:[%s1 + $0x10] sm:$0xff]
      %v225 = vld [vmem:[%s1 + $0x18] sm:$0xff]
      %227 = vset.pattern.permute.xlu0 0
      %228 = vperm.xlu0 %227, %v222
      %v229 = vpop.permute.xlu0 %228
      %232 = vset.pattern.permute.xlu0 0
      %233 = vperm.xlu0 %232, %v223
      %v234 = vpop.permute.xlu0 %233
      %237 = vset.pattern.permute.xlu0 0
      %238 = vperm.xlu0 %237, %v224
      %v239 = vpop.permute.xlu0 %238
      %242 = vset.pattern.permute.xlu0 0
      %243 = vperm.xlu0 %242, %v225
      %v244 = vpop.permute.xlu0 %243
      %v246 = vmul.f32 %v214, %v229
      %v247 = vmul.f32 %v215, %v229
      %v248 = vmul.f32 %v216, %v234
      %v249 = vmul.f32 %v217, %v234
      %v250 = vmul.f32 %v218, %v239
      %v251 = vmul.f32 %v219, %v239
      %v252 = vmul.f32 %v220, %v244
      %v253 = vmul.f32 %v221, %v244
      %v254 = vld [vmem:[%s2] sm:$0xff]
      %v255 = vld [vmem:[%s2 + $0x8] sm:$0xff]
      %v256 = vld [vmem:[%s2 + $0x10] sm:$0xff]
      %v257 = vld [vmem:[%s2 + $0x18] sm:$0xff]
      %259 = vset.pattern.permute.xlu0 0
      %260 = vperm.xlu0 %259, %v254
      %v261 = vpop.permute.xlu0 %260
      %264 = vset.pattern.permute.xlu0 0
      %265 = vperm.xlu0 %264, %v255
      %v266 = vpop.permute.xlu0 %265
      %269 = vset.pattern.permute.xlu0 0
      %270 = vperm.xlu0 %269, %v256
      %v271 = vpop.permute.xlu0 %270
      %274 = vset.pattern.permute.xlu0 0
      %275 = vperm.xlu0 %274, %v257
      %v276 = vpop.permute.xlu0 %275
      %v278 = vadd.f32 %v246, %v261
      %v279 = vadd.f32 %v247, %v261
      %v280 = vadd.f32 %v248, %v266
      %v281 = vadd.f32 %v249, %v266
      %v282 = vadd.f32 %v250, %v271
      %v283 = vadd.f32 %v251, %v271
      %v284 = vadd.f32 %v252, %v276
      %v285 = vadd.f32 %v253, %v276
      %286 = vst [vmem:[%s208] sm:$0xff] %v278
      %287 = vst [vmem:[%s208 + $0x8] sm:$0xff] %v279
      %288 = vst [vmem:[%s208 + $0x10] sm:$0xff] %v280
      %289 = vst [vmem:[%s208 + $0x18] sm:$0xff] %v281
      %290 = vst [vmem:[%s208 + $0x20] sm:$0xff] %v282
      %291 = vst [vmem:[%s208 + $0x28] sm:$0xff] %v283
      %292 = vst [vmem:[%s208 + $0x30] sm:$0xff] %v284
      %293 = vst [vmem:[%s208 + $0x38] sm:$0xff] %v285
      %s294 = smul.u32 2, %s19
      %p295 = scmp.lt.s32.totalorder %s18, 3
      %s296 = scalar_select %p295, %s18, 3
      %p297 = scmp.lt.s32.totalorder %s294, 1
      %s298 = scalar_select %p297, %s294, 1
      %s299 = smul.addr %s296, 8
      %s300 = sadd.s32 %s298, %s299
      %s301 = smul.addr %s300, 8
      %s302 = scalar_lea.vmem %s3, %s301
      // Predicated region
      $region33: #{stdconv_forward.3} parent=31 // pred_check
        %p303 = pneg %p116
      $region34: #{stdconv_forward.3} parent=31 // pred_check_branch
        %305 = sbr.rel (%p303) target = $region36
      $region35: #{stdconv_forward.3} parent=31 // pred_region
        %s306 = smul.u32 2, %s19
      $region36: #{stdconv_forward.3} parent=31 // pred_fallthru
        _
    $region32: #{stdconv_forward.3} parent=5 // pred_fallthru
      _
    %p307 = scmp.le.s32.totalorder 2, %s9
    // Predicated region
    $region37: #{stdconv_forward.3} parent=5 // pred_check
      %p308 = pneg %p307
    $region38: #{stdconv_forward.3} parent=5 // pred_check_branch
      %310 = sbr.rel (%p308) target = $region40
    $region39: #{stdconv_forward.3} parent=5 // pred_region
      %s311 = ssub.s32 %s9, 2
      // Predicated region
      $region41: #{stdconv_forward.3} parent=39 // pred_check
        %p312 = pneg %p122
      $region42: #{stdconv_forward.3} parent=39 // pred_check_branch
        %314 = sbr.rel (%p312) target = $region44
      $region43: #{stdconv_forward.3} parent=39 // pred_region
        %s315 = smul.u32 2, %s21
        %p316 = scmp.lt.s32.totalorder %s20, 3
        %s317 = scalar_select %p316, %s20, 3
        %p318 = scmp.lt.s32.totalorder %s315, 1
        %s319 = scalar_select %p318, %s315, 1
        %s320 = smul.addr %s317, 8
        %s321 = sadd.s32 %s319, %s320
        %s322 = smul.addr %s321, 8
        %s323 = scalar_lea.vmem %s3, %s322
      $region44: #{stdconv_forward.3} parent=39 // pred_fallthru
        _
    $region40: #{stdconv_forward.3} parent=5 // pred_fallthru
      _
  $region6: #{stdconv_forward.3} parent=0 // loop_footer
    %s13 = sadd.s32 1, %s9
  $region7: #{stdconv_forward.3} parent=0 // loop_footer_branch
    %8 = sbr.rel target = $region3
  $region8: #{stdconv_forward.3} parent=0 // loop_exit
    _

// kernel: stdconv_forward.2
$region0: #{stdconv_forward.2}
  #allocation0 [shape = 'u32[]', space=smem, size = 0x4, offset = 0x4, fixed_abs, tag = 'smem constant byte address 0x4 - core index']
  #allocation1 [shape = 'u32[144,128]{1,0:T(1,128)}', space=vmem, size = 0x12000, scoped, tag = 'internal scratch']
  %s0 = inlined_call_operand.vmem [shape: bf16[4,18,18,16], index: 0, kind: input, shape index: {}]
  %s1 = inlined_call_operand.vmem [shape: bf16[32,144], index: 1, kind: input, shape index: {}]
  %s2 = inlined_call_operand.vmem [shape: bf16[4,32,256], index: 2, kind: output, shape index: {0}]
  %s3 = inlined_call_operand.vmem [shape: f32[4,1,32,1], index: 3, kind: output, shape index: {1}]
  %s4 = inlined_call_operand.vmem [shape: f32[4,1,32,1], index: 4, kind: output, shape index: {2}]
  %5 = xla_tuple %s2, %s3, %s4
  %s6 = sld [smem:[#allocation0]]
  $region57: #{stdconv_forward.2} parent=0
    _
  %s8 = ssub.s32 1, %s6
  %s9 = scalar_select 0, %s8, %s6
  loop: start=0, step=1, limit=6
  $region2: #{stdconv_forward.2} parent=0 // loop_pre_header
    _
  $region3: #{stdconv_forward.2} parent=0 // loop_header
    %s11 = sphi 0, %s15
    %p12 = scmp.ge.s32.totalorder %s11, 6
    %s18 = sphi 0, %s30
    %s19 = sphi 0, %s26
    %s20 = sphi 0, %s18
    %s21 = sphi 0, %s19
    %s22 = sphi 0, %s20
    %s23 = sphi 0, %s21
    %s33 = sphi 0, %s35
    %s36 = sphi 0, %s33
    %s37 = sphi 0, %s36
    %s53 = sphi 0, %s37
    %s57 = sphi 0, %s57
    %s59 = sphi 0, %s57
    %s60 = sphi 0, %s59
    %s74 = sphi 0, %s60
    %s82 = sphi 0, %s84
    %s85 = sphi 0, %s82
    %s86 = sphi 0, %s85
    %s102 = sphi 0, %s86
    %s110 = sphi 0, %s112
    %s113 = sphi 0, %s110
    %s114 = sphi 0, %s113
    %s130 = sphi 0, %s114
    %s138 = sphi 0, %s140
    %s141 = sphi 0, %s138
    %s142 = sphi 0, %s141
    %s158 = sphi 0, %s142
  $region4: #{stdconv_forward.2} parent=0 // loop_header_branch
    %14 = sbr.rel (%p12) target = $region8
  $region5: #{stdconv_forward.2} parent=0 // loop_body
    %s16 = ssub.s32 %s11, 1
    %s17 = ssub.s32 %s11, 2
    %s24 = sadd.s32 1, %s19
    %p25 = scmp.ge.s32.totalorder %s24, 1
    %s26 = scalar_select %p25, 0, %s24
    %s27 = sadd.s32 1, %s18
    %s28 = scalar_select %p25, %s27, %s18
    %p29 = scmp.ge.s32.totalorder %s28, 4
    %s30 = scalar_select %p29, 0, %s28
    %s31 = ssub.s32 %s18, %s30
    %p32 = scmp.eq.s32.totalorder %s31, 0
    %s34 = sadd.s32 %s33, 1
    %s35 = scalar_select %p32, %s33, %s34
    %p38 = pneg %p32
    %p39 = scmp.eq.s32.totalorder %s11, 3
    %p40 = por %p38, %p39
    %p41 = scmp.ne.s32.totalorder %s33, %s36
    %p42 = scmp.eq.s32.totalorder %s11, 0
    %p43 = por %p41, %p42
    %p44 = scmp.ne.s32.totalorder %s33, %s36
    %p45 = scmp.eq.s32.totalorder %s16, 3
    %p46 = por %p44, %p45
    %p47 = scmp.ne.s32.totalorder %s36, %s37
    %p48 = scmp.eq.s32.totalorder %s16, 0
    %p49 = por %p47, %p48
    %p50 = scmp.ne.s32.totalorder %s36, %s37
    %p51 = scmp.eq.s32.totalorder %s17, 3
    %p52 = por %p50, %p51
    %p54 = scmp.ne.s32.totalorder %s37, %s53
    %p55 = scmp.eq.s32.totalorder %s17, 0
    %p56 = por %p54, %p55
    %s58 = sadd.s32 %s57, 1
    %p61 = scmp.eq.s32.totalorder %s11, 3
    %p62 = scmp.ne.s32.totalorder %s57, %s59
    %p63 = scmp.eq.s32.totalorder %s11, 0
    %p64 = por %p62, %p63
    %p65 = scmp.ne.s32.totalorder %s57, %s59
    %p66 = scmp.eq.s32.totalorder %s16, 3
    %p67 = por %p65, %p66
    %p68 = scmp.ne.s32.totalorder %s59, %s60
    %p69 = scmp.eq.s32.totalorder %s16, 0
    %p70 = por %p68, %p69
    %p71 = scmp.ne.s32.totalorder %s59, %s60
    %p72 = scmp.eq.s32.totalorder %s17, 3
    %p73 = por %p71, %p72
    %p75 = scmp.ne.s32.totalorder %s60, %s74
    %p76 = scmp.eq.s32.totalorder %s17, 0
    %p77 = por %p75, %p76
    %s78 = ssub.s32 %s18, %s30
    %s79 = ssub.s32 %s19, %s26
    %s80 = sor.u32 %s78, %s79
    %p81 = scmp.eq.s32.totalorder %s80, 0
    %s83 = sadd.s32 %s82, 1
    %s84 = scalar_select %p81, %s82, %s83
    %p87 = pneg %p81
    %p88 = scmp.eq.s32.totalorder %s11, 3
    %p89 = por %p87, %p88
    %p90 = scmp.ne.s32.totalorder %s82, %s85
    %p91 = scmp.eq.s32.totalorder %s11, 0
    %p92 = por %p90, %p91
    %p93 = scmp.ne.s32.totalorder %s82, %s85
    %p94 = scmp.eq.s32.totalorder %s16, 3
    %p95 = por %p93, %p94
    %p96 = scmp.ne.s32.totalorder %s85, %s86
    %p97 = scmp.eq.s32.totalorder %s16, 0
    %p98 = por %p96, %p97
    %p99 = scmp.ne.s32.totalorder %s85, %s86
    %p100 = scmp.eq.s32.totalorder %s17, 3
    %p101 = por %p99, %p100
    %p103 = scmp.ne.s32.totalorder %s86, %s102
    %p104 = scmp.eq.s32.totalorder %s17, 0
    %p105 = por %p103, %p104
    %s106 = ssub.s32 %s18, %s30
    %s107 = ssub.s32 %s19, %s26
    %s108 = sor.u32 %s106, %s107
    %p109 = scmp.eq.s32.totalorder %s108, 0
    %s111 = sadd.s32 %s110, 1
    %s112 = scalar_select %p109, %s110, %s111
    %p115 = pneg %p109
    %p116 = scmp.eq.s32.totalorder %s11, 3
    %p117 = por %p115, %p116
    %p118 = scmp.ne.s32.totalorder %s110, %s113
    %p119 = scmp.eq.s32.totalorder %s11, 0
    %p120 = por %p118, %p119
    %p121 = scmp.ne.s32.totalorder %s110, %s113
    %p122 = scmp.eq.s32.totalorder %s16, 3
    %p123 = por %p121, %p122
    %p124 = scmp.ne.s32.totalorder %s113, %s114
    %p125 = scmp.eq.s32.totalorder %s16, 0
    %p126 = por %p124, %p125
    %p127 = scmp.ne.s32.totalorder %s113, %s114
    %p128 = scmp.eq.s32.totalorder %s17, 3
    %p129 = por %p127, %p128
    %p131 = scmp.ne.s32.totalorder %s114, %s130
    %p132 = scmp.eq.s32.totalorder %s17, 0
    %p133 = por %p131, %p132
    %s134 = ssub.s32 %s18, %s30
    %s135 = ssub.s32 %s19, %s26
    %s136 = sor.u32 %s134, %s135
    %p137 = scmp.eq.s32.totalorder %s136, 0
    %s139 = sadd.s32 %s138, 1
    %s140 = scalar_select %p137, %s138, %s139
    %p143 = pneg %p137
    %p144 = scmp.eq.s32.totalorder %s11, 3
    %p145 = por %p143, %p144
    %p146 = scmp.ne.s32.totalorder %s138, %s141
    %p147 = scmp.eq.s32.totalorder %s11, 0
    %p148 = por %p146, %p147
    %p149 = scmp.ne.s32.totalorder %s138, %s141
    %p150 = scmp.eq.s32.totalorder %s16, 3
    %p151 = por %p149, %p150
    %p152 = scmp.ne.s32.totalorder %s141, %s142
    %p153 = scmp.eq.s32.totalorder %s16, 0
    %p154 = por %p152, %p153
    %p155 = scmp.ne.s32.totalorder %s141, %s142
    %p156 = scmp.eq.s32.totalorder %s17, 3
    %p157 = por %p155, %p156
    %p159 = scmp.ne.s32.totalorder %s142, %s158
    %p160 = scmp.eq.s32.totalorder %s17, 0
    %p161 = por %p159, %p160
    %p162 = scmp.le.s32.totalorder 1, %s11
    %p163 = scmp.lt.s32.totalorder %s11, 5
    %p164 = pnand %p162, %p163
    %p165 = pneg %p164
    // Predicated region
    $region9: #{stdconv_forward.2} parent=5 // pred_check
      _
    $region10: #{stdconv_forward.2} parent=5 // pred_check_branch
      %167 = sbr.rel (%p164) target = $region12
    $region11: #{stdconv_forward.2} parent=5 // pred_region
      %s168 = ssub.s32 %s11, 1
      // Predicated region
      $region13: #{stdconv_forward.2} parent=11 // pred_check
        %p169 = pneg %p70
      $region14: #{stdconv_forward.2} parent=11 // pred_check_branch
        %171 = sbr.rel (%p169) target = $region16
      $region15: #{stdconv_forward.2} parent=11 // pred_region
        _
      $region16: #{stdconv_forward.2} parent=11 // pred_fallthru
        _
    $region12: #{stdconv_forward.2} parent=5 // pred_fallthru
      _
    %p172 = scmp.lt.s32.totalorder %s11, 4
    // Predicated region
    $region17: #{stdconv_forward.2} parent=5 // pred_check
      %p173 = pneg %p172
    $region18: #{stdconv_forward.2} parent=5 // pred_check_branch
      %175 = sbr.rel (%p173) target = $region20
    $region19: #{stdconv_forward.2} parent=5 // pred_region
      // Predicated region
      $region21: #{stdconv_forward.2} parent=19 // pred_check
        %p176 = pneg %p43
      $region22: #{stdconv_forward.2} parent=19 // pred_check_branch
        %178 = sbr.rel (%p176) target = $region24
      $region23: #{stdconv_forward.2} parent=19 // pred_region
        %p179 = scmp.lt.s32.totalorder %s18, 3
        %s180 = scalar_select %p179, %s18, 3
        %s181 = smul.addr %s180, 54
        %s182 = smul.addr %s181, 4
        %s183 = scalar_lea.vmem %s0, %s182
      $region24: #{stdconv_forward.2} parent=19 // pred_fallthru
        _
    $region20: #{stdconv_forward.2} parent=5 // pred_fallthru
      _
    %p184 = scmp.le.s32.totalorder 1, %s11
    %p185 = scmp.lt.s32.totalorder %s11, 5
    %p186 = pnand %p184, %p185
    %p187 = pneg %p186
    // Predicated region
    $region25: #{stdconv_forward.2} parent=5 // pred_check
      _
    $region26: #{stdconv_forward.2} parent=5 // pred_check_branch
      %189 = sbr.rel (%p186) target = $region28
    $region27: #{stdconv_forward.2} parent=5 // pred_region
      %s190 = ssub.s32 %s11, 1
      %p191 = scmp.lt.s32.totalorder %s20, 3
      %s192 = scalar_select %p191, %s20, 3
      %s193 = smul.addr %s192, 54
      %s194 = smul.addr %s193, 4
      %s195 = scalar_lea.vmem %s0, %s194
      %p196 = pneg %p49
      %p197 = pneg %p46
      %p198 = pneg %p70
      %p199 = pneg %p67
      %p200 = pneg %p98
      %p201 = pneg %p95
      %s202 = smul.u32 2, %s21
      %p203 = scmp.lt.s32.totalorder %s20, 3
      %s204 = scalar_select %p203, %s20, 3
      %p205 = scmp.lt.s32.totalorder %s202, 1
      %s206 = scalar_select %p205, %s202, 1
      %s207 = smul.addr %s204, 8
      %s208 = sadd.s32 %s206, %s207
      %s209 = smul.addr %s208, 4
      %s210 = scalar_lea.vmem %s2, %s209
      %p211 = pneg %p126
      %p212 = pneg %p123
      %p213 = scmp.lt.s32.totalorder %s20, 3
      %s214 = scalar_select %p213, %s20, 3
      %p215 = scmp.lt.s32.totalorder %s21, 0
      %s216 = scalar_select %p215, %s21, 0
      %s217 = smul.addr %s216, 4
      %s218 = smul.addr %s214, 4
      %s219 = sadd.s32 %s217, %s218
      %s220 = smul.addr %s219, 8
      %s221 = scalar_lea.vmem %s3, %s220
      %p222 = pneg %p154
      %p223 = pneg %p151
      %p224 = scmp.lt.s32.totalorder %s20, 3
      %s225 = scalar_select %p224, %s20, 3
      %p226 = scmp.lt.s32.totalorder %s21, 0
      %s227 = scalar_select %p226, %s21, 0
      %s228 = smul.addr %s227, 4
      %s229 = smul.addr %s225, 4
      %s230 = sadd.s32 %s228, %s229
      %s231 = smul.addr %s230, 8
      %s232 = scalar_lea.vmem %s4, %s231
      %p233 = scmp.lt.s32.totalorder %s20, 3
      %s234 = scalar_select %p233, %s20, 3
      %s235 = smul.addr %s234, 54
      %s236 = smul.addr %s235, 4
      %s237 = scalar_lea.vmem %s0, %s236
      %s238 = smul.u32 2, %s21
      %p239 = scmp.lt.s32.totalorder %s20, 3
      %s240 = scalar_select %p239, %s20, 3
      %p241 = scmp.lt.s32.totalorder %s238, 1
      %s242 = scalar_select %p241, %s238, 1
      %s243 = smul.addr %s240, 8
      %s244 = sadd.s32 %s242, %s243
      %s245 = smul.addr %s244, 4
      %s246 = scalar_lea.vmem %s2, %s245
      %s247 = smul.u32 2, %s21
      %p248 = scmp.lt.s32.totalorder %s20, 3
      %s249 = scalar_select %p248, %s20, 3
      %p250 = scmp.lt.s32.totalorder %s21, 0
      %s251 = scalar_select %p250, %s21, 0
      %s252 = smul.addr %s251, 4
      %s253 = smul.addr %s249, 4
      %s254 = sadd.s32 %s252, %s253
      %s255 = smul.addr %s254, 8
      %s256 = scalar_lea.vmem %s3, %s255
      %p257 = scmp.lt.s32.totalorder %s20, 3
      %s258 = scalar_select %p257, %s20, 3
      %p259 = scmp.lt.s32.totalorder %s21, 0
      %s260 = scalar_select %p259, %s21, 0
      %s261 = smul.addr %s260, 4
      %s262 = smul.addr %s258, 4
      %s263 = sadd.s32 %s261, %s262
      %s264 = smul.addr %s263, 8
      %s265 = scalar_lea.vmem %s4, %s264
      %s266 = smul.u32 %s21, 16
      %s267 = smul.u32 %s266, 3
      %s268 = smul.addr %s267, 4
      %s269 = scalar_lea.vmem %s237, %s268
      %v270 = vld [vmem:[%s269] sm:$0xf]
      %v271 = vld [vmem:[%s269 + $0x4] sm:$0xf]
      %v272 = vld [vmem:[%s269 + $0x8] sm:$0x1]
      %v273 = vld [vmem:[%s269 + $0xc] sm:$0xf]
      %v274 = vld [vmem:[%s269 + $0x10] sm:$0xf]
      %v275 = vld [vmem:[%s269 + $0x14] sm:$0x1]
      %v276 = vld [vmem:[%s269 + $0x18] sm:$0xf]
      %v277 = vld [vmem:[%s269 + $0x1c] sm:$0xf]
      %v278 = vld [vmem:[%s269 + $0x20] sm:$0x1]
      %v279 = vld [vmem:[%s269 + $0x24] sm:$0xf]
      %v280 = vld [vmem:[%s269 + $0x28] sm:$0xf]
      %v281 = vld [vmem:[%s269 + $0x2c] sm:$0x1]
      %v282 = vld [vmem:[%s269 + $0x30] sm:$0xf]
      %v283 = vld [vmem:[%s269 + $0x34] sm:$0xf]
      %v284 = vld [vmem:[%s269 + $0x38] sm:$0x1]
      %v285 = vld [vmem:[%s269 + $0x3c] sm:$0xf]
      %v286 = vld [vmem:[%s269 + $0x40] sm:$0xf]
      %v287 = vld [vmem:[%s269 + $0x44] sm:$0x1]
      %v288 = vld [vmem:[%s269 + $0x48] sm:$0xf]
      %v289 = vld [vmem:[%s269 + $0x4c] sm:$0xf]
      %v290 = vld [vmem:[%s269 + $0x50] sm:$0x1]
      %v291 = vld [vmem:[%s269 + $0x54] sm:$0xf]
      %v292 = vld [vmem:[%s269 + $0x58] sm:$0xf]
      %v293 = vld [vmem:[%s269 + $0x5c] sm:$0x1]
      %v294 = vld [vmem:[%s269 + $0x60] sm:$0xf]
      %v295 = vld [vmem:[%s269 + $0x64] sm:$0xf]
      %v296 = vld [vmem:[%s269 + $0x68] sm:$0x1]
      %v297 = vld [vmem:[%s269 + $0x6c] sm:$0xf]
      %v298 = vld [vmem:[%s269 + $0x70] sm:$0xf]
      %v299 = vld [vmem:[%s269 + $0x74] sm:$0x1]
      %v300 = vld [vmem:[%s269 + $0x78] sm:$0xf]
      %v301 = vld [vmem:[%s269 + $0x7c] sm:$0xf]
      %v302 = vld [vmem:[%s269 + $0x80] sm:$0x1]
      %v303 = vld [vmem:[%s269 + $0x84] sm:$0xf]
      %v304 = vld [vmem:[%s269 + $0x88] sm:$0xf]
      %v305 = vld [vmem:[%s269 + $0x8c] sm:$0x1]
      %v306 = vld [vmem:[%s269 + $0x90] sm:$0xf]
      %v307 = vld [vmem:[%s269 + $0x94] sm:$0xf]
      %v308 = vld [vmem:[%s269 + $0x98] sm:$0x1]
      %v309 = vld [vmem:[%s269 + $0x9c] sm:$0xf]
      %v310 = vld [vmem:[%s269 + $0xa0] sm:$0xf]
      %v311 = vld [vmem:[%s269 + $0xa4] sm:$0x1]
      %v312 = vld [vmem:[%s269 + $0xa8] sm:$0xf]
      %v313 = vld [vmem:[%s269 + $0xac] sm:$0xf]
      %v314 = vld [vmem:[%s269 + $0xb0] sm:$0x1]
      %v315 = vld [vmem:[%s269 + $0xb4] sm:$0xf]
      %v316 = vld [vmem:[%s269 + $0xb8] sm:$0xf]
      %v317 = vld [vmem:[%s269 + $0xbc] sm:$0x1]
      %v318 = vld [vmem:[%s269 + $0xc0] sm:$0xf]
      %v319 = vld [vmem:[%s269 + $0xc4] sm:$0xf]
      %v320 = vld [vmem:[%s269 + $0xc8] sm:$0x1]
      %v321 = vld [vmem:[%s269 + $0xcc] sm:$0xf]
      %v322 = vld [vmem:[%s269 + $0xd0] sm:$0xf]
      %v323 = vld [vmem:[%s269 + $0xd4] sm:$0x1]
      %v324 = vunpack.c.l.bf16 %v270
      %v325 = vunpack.c.l.bf16 %v271
      %v326 = vunpack.c.l.bf16 %v272
      %v327 = vunpack.c.l.bf16 %v273
      %v328 = vunpack.c.l.bf16 %v274
      %v329 = vunpack.c.l.bf16 %v275
      %v330 = vunpack.c.l.bf16 %v276
      %v331 = vunpack.c.l.bf16 %v277
      %v332 = vunpack.c.l.bf16 %v278
      %v333 = vunpack.c.l.bf16 %v279
      %v334 = vunpack.c.l.bf16 %v280
      %v335 = vunpack.c.l.bf16 %v281
      %v336 = vunpack.c.l.bf16 %v282
      %v337 = vunpack.c.l.bf16 %v283
      %v338 = vunpack.c.l.bf16 %v284
      %v339 = vunpack.c.l.bf16 %v285
      %v340 = vunpack.c.l.bf16 %v286
      %v341 = vunpack.c.l.bf16 %v287
      %v342 = vunpack.c.l.bf16 %v288
      %v343 = vunpack.c.l.bf16 %v289
      %v344 = vunpack.c.l.bf16 %v290
      %v345 = vunpack.c.l.bf16 %v291
      %v346 = vunpack.c.l.bf16 %v292
      %v347 = vunpack.c.l.bf16 %v293
      %v348 = vunpack.c.l.bf16 %v294
      %v349 = vunpack.c.l.bf16 %v295
      %v350 = vunpack.c.l.bf16 %v296
      %v351 = vunpack.c.l.bf16 %v297
      %v352 = vunpack.c.l.bf16 %v298
      %v353 = vunpack.c.l.bf16 %v299
      %v354 = vunpack.c.l.bf16 %v300
      %v355 = vunpack.c.l.bf16 %v301
      %v356 = vunpack.c.l.bf16 %v302
      %v357 = vunpack.c.l.bf16 %v303
      %v358 = vunpack.c.l.bf16 %v304
      %v359 = vunpack.c.l.bf16 %v305
      %v360 = vunpack.c.l.bf16 %v306
      %v361 = vunpack.c.l.bf16 %v307
      %v362 = vunpack.c.l.bf16 %v308
      %v363 = vunpack.c.l.bf16 %v309
      %v364 = vunpack.c.l.bf16 %v310
      %v365 = vunpack.c.l.bf16 %v311
      %v366 = vunpack.c.l.bf16 %v312
      %v367 = vunpack.c.l.bf16 %v313
      %v368 = vunpack.c.l.bf16 %v314
      %v369 = vunpack.c.l.bf16 %v315
      %v370 = vunpack.c.l.bf16 %v316
      %v371 = vunpack.c.l.bf16 %v317
      %v372 = vunpack.c.l.bf16 %v318
      %v373 = vunpack.c.l.bf16 %v319
      %v374 = vunpack.c.l.bf16 %v320
      %v375 = vunpack.c.l.bf16 %v321
      %v376 = vunpack.c.l.bf16 %v322
      %v377 = vunpack.c.l.bf16 %v323
      %v378 = vmax.f32 %v324, 0.0
      %v379 = vmax.f32 %v325, 0.0
      %v380 = vmax.f32 %v326, 0.0
      %v381 = vmax.f32 %v327, 0.0
      %v382 = vmax.f32 %v328, 0.0
      %v383 = vmax.f32 %v329, 0.0
      %v384 = vmax.f32 %v330, 0.0
      %v385 = vmax.f32 %v331, 0.0
      %v386 = vmax.f32 %v332, 0.0
      %v387 = vmax.f32 %v333, 0.0
      %v388 = vmax.f32 %v334, 0.0
      %v389 = vmax.f32 %v335, 0.0
      %v390 = vmax.f32 %v336, 0.0
      %v391 = vmax.f32 %v337, 0.0
      %v392 = vmax.f32 %v338, 0.0
      %v393 = vmax.f32 %v339, 0.0
      %v394 = vmax.f32 %v340, 0.0
      %v395 = vmax.f32 %v341, 0.0
      %v396 = vmax.f32 %v342, 0.0
      %v397 = vmax.f32 %v343, 0.0
      %v398 = vmax.f32 %v344, 0.0
      %v399 = vmax.f32 %v345, 0.0
      %v400 = vmax.f32 %v346, 0.0
      %v401 = vmax.f32 %v347, 0.0
      %v402 = vmax.f32 %v348, 0.0
      %v403 = vmax.f32 %v349, 0.0
      %v404 = vmax.f32 %v350, 0.0
      %v405 = vmax.f32 %v351, 0.0
      %v406 = vmax.f32 %v352, 0.0
      %v407 = vmax.f32 %v353, 0.0
      %v408 = vmax.f32 %v354, 0.0
      %v409 = vmax.f32 %v355, 0.0
      %v410 = vmax.f32 %v356, 0.0
      %v411 = vmax.f32 %v357, 0.0
      %v412 = vmax.f32 %v358, 0.0
      %v413 = vmax.f32 %v359, 0.0
      %v414 = vmax.f32 %v360, 0.0
      %v415 = vmax.f32 %v361, 0.0
      %v416 = vmax.f32 %v362, 0.0
      %v417 = vmax.f32 %v363, 0.0
      %v418 = vmax.f32 %v364, 0.0
      %v419 = vmax.f32 %v365, 0.0
      %v420 = vmax.f32 %v366, 0.0
      %v421 = vmax.f32 %v367, 0.0
      %v422 = vmax.f32 %v368, 0.0
      %v423 = vmax.f32 %v369, 0.0
      %v424 = vmax.f32 %v370, 0.0
      %v425 = vmax.f32 %v371, 0.0
      %v426 = vmax.f32 %v372, 0.0
      %v427 = vmax.f32 %v373, 0.0
      %v428 = vmax.f32 %v374, 0.0
      %v429 = vmax.f32 %v375, 0.0
      %v430 = vmax.f32 %v376, 0.0
      %v431 = vmax.f32 %v377, 0.0
      %vm480 = vcmask 1046528
      %v481 = vrot.slane %v378, 1
      %v482 = vrot.slane %v379, 1
      %v483 = vsel %vm480, %v481, %v482
      %v484 = vrot.slane %v380, 1
      %v485 = vsel %vm480, %v482, %v484
      %v486 = vrot.slane %v381, 1
      %v487 = vrot.slane %v382, 1
      %v488 = vsel %vm480, %v486, %v487
      %v489 = vrot.slane %v383, 1
      %v490 = vsel %vm480, %v487, %v489
      %v491 = vrot.slane %v384, 1
      %v492 = vrot.slane %v385, 1
      %v493 = vsel %vm480, %v491, %v492
      %v494 = vrot.slane %v386, 1
      %v495 = vsel %vm480, %v492, %v494
      %v496 = vrot.slane %v387, 1
      %v497 = vrot.slane %v388, 1
      %v498 = vsel %vm480, %v496, %v497
      %v499 = vrot.slane %v389, 1
      %v500 = vsel %vm480, %v497, %v499
      %v501 = vrot.slane %v390, 1
      %v502 = vrot.slane %v391, 1
      %v503 = vsel %vm480, %v501, %v502
      %v504 = vrot.slane %v392, 1
      %v505 = vsel %vm480, %v502, %v504
      %v506 = vrot.slane %v393, 1
      %v507 = vrot.slane %v394, 1
      %v508 = vsel %vm480, %v506, %v507
      %v509 = vrot.slane %v395, 1
      %v510 = vsel %vm480, %v507, %v509
      %v511 = vrot.slane %v396, 1
      %v512 = vrot.slane %v397, 1
      %v513 = vsel %vm480, %v511, %v512
      %v514 = vrot.slane %v398, 1
      %v515 = vsel %vm480, %v512, %v514
      %v516 = vrot.slane %v399, 1
      %v517 = vrot.slane %v400, 1
      %v518 = vsel %vm480, %v516, %v517
      %v519 = vrot.slane %v401, 1
      %v520 = vsel %vm480, %v517, %v519
      %v521 = vrot.slane %v402, 1
      %v522 = vrot.slane %v403, 1
      %v523 = vsel %vm480, %v521, %v522
      %v524 = vrot.slane %v404, 1
      %v525 = vsel %vm480, %v522, %v524
      %v526 = vrot.slane %v405, 1
      %v527 = vrot.slane %v406, 1
      %v528 = vsel %vm480, %v526, %v527
      %v529 = vrot.slane %v407, 1
      %v530 = vsel %vm480, %v527, %v529
      %v531 = vrot.slane %v408, 1
      %v532 = vrot.slane %v409, 1
      %v533 = vsel %vm480, %v531, %v532
      %v534 = vrot.slane %v410, 1
      %v535 = vsel %vm480, %v532, %v534
      %v536 = vrot.slane %v411, 1
      %v537 = vrot.slane %v412, 1
      %v538 = vsel %vm480, %v536, %v537
      %v539 = vrot.slane %v413, 1
      %v540 = vsel %vm480, %v537, %v539
      %v541 = vrot.slane %v414, 1
      %v542 = vrot.slane %v415, 1
      %v543 = vsel %vm480, %v541, %v542
      %v544 = vrot.slane %v416, 1
      %v545 = vsel %vm480, %v542, %v544
      %v546 = vrot.slane %v417, 1
      %v547 = vrot.slane %v418, 1
      %v548 = vsel %vm480, %v546, %v547
      %v549 = vrot.slane %v419, 1
      %v550 = vsel %vm480, %v547, %v549
      %v551 = vrot.slane %v420, 1
      %v552 = vrot.slane %v421, 1
      %v553 = vsel %vm480, %v551, %v552
      %v554 = vrot.slane %v422, 1
      %v555 = vsel %vm480, %v552, %v554
      %v556 = vrot.slane %v423, 1
      %v557 = vrot.slane %v424, 1
      %v558 = vsel %vm480, %v556, %v557
      %v559 = vrot.slane %v425, 1
      %v560 = vsel %vm480, %v557, %v559
      %561 = vrot.lane.b32.xlu0 %v483, 16
      %v562 = vpop.permute.xlu0 %561
      %563 = vrot.lane.b32.xlu0 %v485, 16
      %v564 = vpop.permute.xlu0 %563
      %565 = vrot.lane.b32.xlu0 %v488, 16
      %v566 = vpop.permute.xlu0 %565
      %567 = vrot.lane.b32.xlu0 %v490, 16
      %v568 = vpop.permute.xlu0 %567
      %569 = vrot.lane.b32.xlu0 %v493, 16
      %v570 = vpop.permute.xlu0 %569
      %571 = vrot.lane.b32.xlu0 %v495, 16
      %v572 = vpop.permute.xlu0 %571
      %573 = vrot.lane.b32.xlu0 %v498, 16
      %v574 = vpop.permute.xlu0 %573
      %575 = vrot.lane.b32.xlu0 %v500, 16
      %v576 = vpop.permute.xlu0 %575
      %577 = vrot.lane.b32.xlu0 %v503, 16
      %v578 = vpop.permute.xlu0 %577
      %579 = vrot.lane.b32.xlu0 %v505, 16
      %v580 = vpop.permute.xlu0 %579
      %581 = vrot.lane.b32.xlu0 %v508, 16
      %v582 = vpop.permute.xlu0 %581
      %583 = vrot.lane.b32.xlu0 %v510, 16
      %v584 = vpop.permute.xlu0 %583
      %585 = vrot.lane.b32.xlu0 %v513, 16
      %v586 = vpop.permute.xlu0 %585
      %587 = vrot.lane.b32.xlu0 %v515, 16
      %v588 = vpop.permute.xlu0 %587
      %589 = vrot.lane.b32.xlu0 %v518, 16
      %v590 = vpop.permute.xlu0 %589
      %591 = vrot.lane.b32.xlu0 %v520, 16
      %v592 = vpop.permute.xlu0 %591
      %593 = vrot.lane.b32.xlu0 %v523, 16
      %v594 = vpop.permute.xlu0 %593
      %595 = vrot.lane.b32.xlu0 %v525, 16
      %v596 = vpop.permute.xlu0 %595
      %597 = vrot.lane.b32.xlu0 %v528, 16
      %v598 = vpop.permute.xlu0 %597
      %599 = vrot.lane.b32.xlu0 %v530, 16
      %v600 = vpop.permute.xlu0 %599
      %601 = vrot.lane.b32.xlu0 %v533, 16
      %v602 = vpop.permute.xlu0 %601
      %603 = vrot.lane.b32.xlu0 %v535, 16
      %v604 = vpop.permute.xlu0 %603
      %605 = vrot.lane.b32.xlu0 %v538, 16
      %v606 = vpop.permute.xlu0 %605
      %607 = vrot.lane.b32.xlu0 %v540, 16
      %v608 = vpop.permute.xlu0 %607
      %609 = vrot.lane.b32.xlu0 %v543, 16
      %v610 = vpop.permute.xlu0 %609
      %611 = vrot.lane.b32.xlu0 %v545, 16
      %v612 = vpop.permute.xlu0 %611
      %613 = vrot.lane.b32.xlu0 %v548, 16
      %v614 = vpop.permute.xlu0 %613
      %615 = vrot.lane.b32.xlu0 %v550, 16
      %v616 = vpop.permute.xlu0 %615
      %617 = vrot.lane.b32.xlu0 %v553, 16
      %v618 = vpop.permute.xlu0 %617
      %619 = vrot.lane.b32.xlu0 %v555, 16
      %v620 = vpop.permute.xlu0 %619
      %621 = vrot.lane.b32.xlu0 %v558, 16
      %v622 = vpop.permute.xlu0 %621
      %623 = vrot.lane.b32.xlu0 %v560, 16
      %v624 = vpop.permute.xlu0 %623
      %vm657 = vcmask 1045504
      %v658 = vrot.slane %v378, 2
      %v659 = vrot.slane %v379, 2
      %v660 = vsel %vm657, %v658, %v659
      %v661 = vrot.slane %v380, 2
      %v662 = vsel %vm657, %v659, %v661
      %v663 = vrot.slane %v381, 2
      %v664 = vrot.slane %v382, 2
      %v665 = vsel %vm657, %v663, %v664
      %v666 = vrot.slane %v383, 2
      %v667 = vsel %vm657, %v664, %v666
      %v668 = vrot.slane %v384, 2
      %v669 = vrot.slane %v385, 2
      %v670 = vsel %vm657, %v668, %v669
      %v671 = vrot.slane %v386, 2
      %v672 = vsel %vm657, %v669, %v671
      %v673 = vrot.slane %v387, 2
      %v674 = vrot.slane %v388, 2
      %v675 = vsel %vm657, %v673, %v674
      %v676 = vrot.slane %v389, 2
      %v677 = vsel %vm657, %v674, %v676
      %v678 = vrot.slane %v390, 2
      %v679 = vrot.slane %v391, 2
      %v680 = vsel %vm657, %v678, %v679
      %v681 = vrot.slane %v392, 2
      %v682 = vsel %vm657, %v679, %v681
      %v683 = vrot.slane %v393, 2
      %v684 = vrot.slane %v394, 2
      %v685 = vsel %vm657, %v683, %v684
      %v686 = vrot.slane %v395, 2
      %v687 = vsel %vm657, %v684, %v686
      %v688 = vrot.slane %v396, 2
      %v689 = vrot.slane %v397, 2
      %v690 = vsel %vm657, %v688, %v689
      %v691 = vrot.slane %v398, 2
      %v692 = vsel %vm657, %v689, %v691
      %v693 = vrot.slane %v399, 2
      %v694 = vrot.slane %v400, 2
      %v695 = vsel %vm657, %v693, %v694
      %v696 = vrot.slane %v401, 2
      %v697 = vsel %vm657, %v694, %v696
      %v698 = vrot.slane %v402, 2
      %v699 = vrot.slane %v403, 2
      %v700 = vsel %vm657, %v698, %v699
      %v701 = vrot.slane %v404, 2
      %v702 = vsel %vm657, %v699, %v701
      %v703 = vrot.slane %v405, 2
      %v704 = vrot.slane %v406, 2
      %v705 = vsel %vm657, %v703, %v704
      %v706 = vrot.slane %v407, 2
      %v707 = vsel %vm657, %v704, %v706
      %v708 = vrot.slane %v408, 2
      %v709 = vrot.slane %v409, 2
      %v710 = vsel %vm657, %v708, %v709
      %v711 = vrot.slane %v410, 2
      %v712 = vsel %vm657, %v709, %v711
      %v713 = vrot.slane %v411, 2
      %v714 = vrot.slane %v412, 2
      %v715 = vsel %vm657, %v713, %v714
      %v716 = vrot.slane %v413, 2
      %v717 = vsel %vm657, %v714, %v716
      %v718 = vrot.slane %v414, 2
      %v719 = vrot.slane %v415, 2
      %v720 = vsel %vm657, %v718, %v719
      %v721 = vrot.slane %v416, 2
      %v722 = vsel %vm657, %v719, %v721
      %v723 = vrot.slane %v417, 2
      %v724 = vrot.slane %v418, 2
      %v725 = vsel %vm657, %v723, %v724
      %v726 = vrot.slane %v419, 2
      %v727 = vsel %vm657, %v724, %v726
      %v728 = vrot.slane %v420, 2
      %v729 = vrot.slane %v421, 2
      %v730 = vsel %vm657, %v728, %v729
      %v731 = vrot.slane %v422, 2
      %v732 = vsel %vm657, %v729, %v731
      %v733 = vrot.slane %v423, 2
      %v734 = vrot.slane %v424, 2
      %v735 = vsel %vm657, %v733, %v734
      %v736 = vrot.slane %v425, 2
      %v737 = vsel %vm657, %v734, %v736
      %738 = vrot.lane.b32.xlu0 %v660, 32
      %v739 = vpop.permute.xlu0 %738
      %740 = vrot.lane.b32.xlu0 %v662, 32
      %v741 = vpop.permute.xlu0 %740
      %742 = vrot.lane.b32.xlu0 %v665, 32
      %v743 = vpop.permute.xlu0 %742
      %744 = vrot.lane.b32.xlu0 %v667, 32
      %v745 = vpop.permute.xlu0 %744
      %746 = vrot.lane.b32.xlu0 %v670, 32
      %v747 = vpop.permute.xlu0 %746
      %748 = vrot.lane.b32.xlu0 %v672, 32
      %v749 = vpop.permute.xlu0 %748
      %750 = vrot.lane.b32.xlu0 %v675, 32
      %v751 = vpop.permute.xlu0 %750
      %752 = vrot.lane.b32.xlu0 %v677, 32
      %v753 = vpop.permute.xlu0 %752
      %754 = vrot.lane.b32.xlu0 %v680, 32
      %v755 = vpop.permute.xlu0 %754
      %756 = vrot.lane.b32.xlu0 %v682, 32
      %v757 = vpop.permute.xlu0 %756
      %758 = vrot.lane.b32.xlu0 %v685, 32
      %v759 = vpop.permute.xlu0 %758
      %760 = vrot.lane.b32.xlu0 %v687, 32
      %v761 = vpop.permute.xlu0 %760
      %762 = vrot.lane.b32.xlu0 %v690, 32
      %v763 = vpop.permute.xlu0 %762
      %764 = vrot.lane.b32.xlu0 %v692, 32
      %v765 = vpop.permute.xlu0 %764
      %766 = vrot.lane.b32.xlu0 %v695, 32
      %v767 = vpop.permute.xlu0 %766
      %768 = vrot.lane.b32.xlu0 %v697, 32
      %v769 = vpop.permute.xlu0 %768
      %770 = vrot.lane.b32.xlu0 %v700, 32
      %v771 = vpop.permute.xlu0 %770
      %772 = vrot.lane.b32.xlu0 %v702, 32
      %v773 = vpop.permute.xlu0 %772
      %774 = vrot.lane.b32.xlu0 %v705, 32
      %v775 = vpop.permute.xlu0 %774
      %776 = vrot.lane.b32.xlu0 %v707, 32
      %v777 = vpop.permute.xlu0 %776
      %778 = vrot.lane.b32.xlu0 %v710, 32
      %v779 = vpop.permute.xlu0 %778
      %780 = vrot.lane.b32.xlu0 %v712, 32
      %v781 = vpop.permute.xlu0 %780
      %782 = vrot.lane.b32.xlu0 %v715, 32
      %v783 = vpop.permute.xlu0 %782
      %784 = vrot.lane.b32.xlu0 %v717, 32
      %v785 = vpop.permute.xlu0 %784
      %786 = vrot.lane.b32.xlu0 %v720, 32
      %v787 = vpop.permute.xlu0 %786
      %788 = vrot.lane.b32.xlu0 %v722, 32
      %v789 = vpop.permute.xlu0 %788
      %790 = vrot.lane.b32.xlu0 %v725, 32
      %v791 = vpop.permute.xlu0 %790
      %792 = vrot.lane.b32.xlu0 %v727, 32
      %v793 = vpop.permute.xlu0 %792
      %794 = vrot.lane.b32.xlu0 %v730, 32
      %v795 = vpop.permute.xlu0 %794
      %796 = vrot.lane.b32.xlu0 %v732, 32
      %v797 = vpop.permute.xlu0 %796
      %798 = vrot.lane.b32.xlu0 %v735, 32
      %v799 = vpop.permute.xlu0 %798
      %800 = vrot.lane.b32.xlu0 %v737, 32
      %v801 = vpop.permute.xlu0 %800
      %836 = vrot.lane.b32.xlu0 %v381, 48
      %v837 = vpop.permute.xlu0 %836
      %838 = vrot.lane.b32.xlu0 %v382, 48
      %v839 = vpop.permute.xlu0 %838
      %840 = vrot.lane.b32.xlu0 %v384, 48
      %v841 = vpop.permute.xlu0 %840
      %842 = vrot.lane.b32.xlu0 %v385, 48
      %v843 = vpop.permute.xlu0 %842
      %844 = vrot.lane.b32.xlu0 %v387, 48
      %v845 = vpop.permute.xlu0 %844
      %846 = vrot.lane.b32.xlu0 %v388, 48
      %v847 = vpop.permute.xlu0 %846
      %848 = vrot.lane.b32.xlu0 %v390, 48
      %v849 = vpop.permute.xlu0 %848
      %850 = vrot.lane.b32.xlu0 %v391, 48
      %v851 = vpop.permute.xlu0 %850
      %852 = vrot.lane.b32.xlu0 %v393, 48
      %v853 = vpop.permute.xlu0 %852
      %854 = vrot.lane.b32.xlu0 %v394, 48
      %v855 = vpop.permute.xlu0 %854
      %856 = vrot.lane.b32.xlu0 %v396, 48
      %v857 = vpop.permute.xlu0 %856
      %858 = vrot.lane.b32.xlu0 %v397, 48
      %v859 = vpop.permute.xlu0 %858
      %860 = vrot.lane.b32.xlu0 %v399, 48
      %v861 = vpop.permute.xlu0 %860
      %862 = vrot.lane.b32.xlu0 %v400, 48
      %v863 = vpop.permute.xlu0 %862
      %864 = vrot.lane.b32.xlu0 %v402, 48
      %v865 = vpop.permute.xlu0 %864
      %866 = vrot.lane.b32.xlu0 %v403, 48
      %v867 = vpop.permute.xlu0 %866
      %868 = vrot.lane.b32.xlu0 %v405, 48
      %v869 = vpop.permute.xlu0 %868
      %870 = vrot.lane.b32.xlu0 %v406, 48
      %v871 = vpop.permute.xlu0 %870
      %872 = vrot.lane.b32.xlu0 %v408, 48
      %v873 = vpop.permute.xlu0 %872
      %874 = vrot.lane.b32.xlu0 %v409, 48
      %v875 = vpop.permute.xlu0 %874
      %876 = vrot.lane.b32.xlu0 %v411, 48
      %v877 = vpop.permute.xlu0 %876
      %878 = vrot.lane.b32.xlu0 %v412, 48
      %v879 = vpop.permute.xlu0 %878
      %880 = vrot.lane.b32.xlu0 %v414, 48
      %v881 = vpop.permute.xlu0 %880
      %882 = vrot.lane.b32.xlu0 %v415, 48
      %v883 = vpop.permute.xlu0 %882
      %884 = vrot.lane.b32.xlu0 %v417, 48
      %v885 = vpop.permute.xlu0 %884
      %886 = vrot.lane.b32.xlu0 %v418, 48
      %v887 = vpop.permute.xlu0 %886
      %888 = vrot.lane.b32.xlu0 %v420, 48
      %v889 = vpop.permute.xlu0 %888
      %890 = vrot.lane.b32.xlu0 %v421, 48
      %v891 = vpop.permute.xlu0 %890
      %892 = vrot.lane.b32.xlu0 %v423, 48
      %v893 = vpop.permute.xlu0 %892
      %894 = vrot.lane.b32.xlu0 %v424, 48
      %v895 = vpop.permute.xlu0 %894
      %896 = vrot.lane.b32.xlu0 %v426, 48
      %v897 = vpop.permute.xlu0 %896
      %898 = vrot.lane.b32.xlu0 %v427, 48
      %v899 = vpop.permute.xlu0 %898
      %v933 = vrot.slane %v426, 1
      %v934 = vrot.slane %v427, 1
      %v935 = vsel %vm480, %v933, %v934
      %v936 = vrot.slane %v428, 1
      %v937 = vsel %vm480, %v934, %v936
      %938 = vrot.lane.b32.xlu0 %v488, 64
      %v939 = vpop.permute.xlu0 %938
      %940 = vrot.lane.b32.xlu0 %v490, 64
      %v941 = vpop.permute.xlu0 %940
      %942 = vrot.lane.b32.xlu0 %v493, 64
      %v943 = vpop.permute.xlu0 %942
      %944 = vrot.lane.b32.xlu0 %v495, 64
      %v945 = vpop.permute.xlu0 %944
      %946 = vrot.lane.b32.xlu0 %v498, 64
      %v947 = vpop.permute.xlu0 %946
      %948 = vrot.lane.b32.xlu0 %v500, 64
      %v949 = vpop.permute.xlu0 %948
      %950 = vrot.lane.b32.xlu0 %v503, 64
      %v951 = vpop.permute.xlu0 %950
      %952 = vrot.lane.b32.xlu0 %v505, 64
      %v953 = vpop.permute.xlu0 %952
      %954 = vrot.lane.b32.xlu0 %v508, 64
      %v955 = vpop.permute.xlu0 %954
      %956 = vrot.lane.b32.xlu0 %v510, 64
      %v957 = vpop.permute.xlu0 %956
      %958 = vrot.lane.b32.xlu0 %v513, 64
      %v959 = vpop.permute.xlu0 %958
      %960 = vrot.lane.b32.xlu0 %v515, 64
      %v961 = vpop.permute.xlu0 %960
      %962 = vrot.lane.b32.xlu0 %v518, 64
      %v963 = vpop.permute.xlu0 %962
      %964 = vrot.lane.b32.xlu0 %v520, 64
      %v965 = vpop.permute.xlu0 %964
      %966 = vrot.lane.b32.xlu0 %v523, 64
      %v967 = vpop.permute.xlu0 %966
      %968 = vrot.lane.b32.xlu0 %v525, 64
      %v969 = vpop.permute.xlu0 %968
      %970 = vrot.lane.b32.xlu0 %v528, 64
      %v971 = vpop.permute.xlu0 %970
      %972 = vrot.lane.b32.xlu0 %v530, 64
      %v973 = vpop.permute.xlu0 %972
      %974 = vrot.lane.b32.xlu0 %v533, 64
      %v975 = vpop.permute.xlu0 %974
      %976 = vrot.lane.b32.xlu0 %v535, 64
      %v977 = vpop.permute.xlu0 %976
      %978 = vrot.lane.b32.xlu0 %v538, 64
      %v979 = vpop.permute.xlu0 %978
      %980 = vrot.lane.b32.xlu0 %v540, 64
      %v981 = vpop.permute.xlu0 %980
      %982 = vrot.lane.b32.xlu0 %v543, 64
      %v983 = vpop.permute.xlu0 %982
      %984 = vrot.lane.b32.xlu0 %v545, 64
      %v985 = vpop.permute.xlu0 %984
      %986 = vrot.lane.b32.xlu0 %v548, 64
      %v987 = vpop.permute.xlu0 %986
      %988 = vrot.lane.b32.xlu0 %v550, 64
      %v989 = vpop.permute.xlu0 %988
      %990 = vrot.lane.b32.xlu0 %v553, 64
      %v991 = vpop.permute.xlu0 %990
      %992 = vrot.lane.b32.xlu0 %v555, 64
      %v993 = vpop.permute.xlu0 %992
      %994 = vrot.lane.b32.xlu0 %v558, 64
      %v995 = vpop.permute.xlu0 %994
      %996 = vrot.lane.b32.xlu0 %v560, 64
      %v997 = vpop.permute.xlu0 %996
      %998 = vrot.lane.b32.xlu0 %v935, 64
      %v999 = vpop.permute.xlu0 %998
      %1000 = vrot.lane.b32.xlu0 %v937, 64
      %v1001 = vpop.permute.xlu0 %1000
      %v1034 = vrot.slane %v426, 2
      %v1035 = vrot.slane %v427, 2
      %v1036 = vsel %vm657, %v1034, %v1035
      %v1037 = vrot.slane %v428, 2
      %v1038 = vsel %vm657, %v1035, %v1037
      %1039 = vrot.lane.b32.xlu0 %v665, 80
      %v1040 = vpop.permute.xlu0 %1039
      %1041 = vrot.lane.b32.xlu0 %v667, 80
      %v1042 = vpop.permute.xlu0 %1041
      %1043 = vrot.lane.b32.xlu0 %v670, 80
      %v1044 = vpop.permute.xlu0 %1043
      %1045 = vrot.lane.b32.xlu0 %v672, 80
      %v1046 = vpop.permute.xlu0 %1045
      %1047 = vrot.lane.b32.xlu0 %v675, 80
      %v1048 = vpop.permute.xlu0 %1047
      %1049 = vrot.lane.b32.xlu0 %v677, 80
      %v1050 = vpop.permute.xlu0 %1049
      %1051 = vrot.lane.b32.xlu0 %v680, 80
      %v1052 = vpop.permute.xlu0 %1051
      %1053 = vrot.lane.b32.xlu0 %v682, 80
      %v1054 = vpop.permute.xlu0 %1053
      %1055 = vrot.lane.b32.xlu0 %v685, 80
      %v1056 = vpop.permute.xlu0 %1055
      %1057 = vrot.lane.b32.xlu0 %v687, 80
      %v1058 = vpop.permute.xlu0 %1057
      %1059 = vrot.lane.b32.xlu0 %v690, 80
      %v1060 = vpop.permute.xlu0 %1059
      %1061 = vrot.lane.b32.xlu0 %v692, 80
      %v1062 = vpop.permute.xlu0 %1061
      %1063 = vrot.lane.b32.xlu0 %v695, 80
      %v1064 = vpop.permute.xlu0 %1063
      %1065 = vrot.lane.b32.xlu0 %v697, 80
      %v1066 = vpop.permute.xlu0 %1065
      %1067 = vrot.lane.b32.xlu0 %v700, 80
      %v1068 = vpop.permute.xlu0 %1067
      %1069 = vrot.lane.b32.xlu0 %v702, 80
      %v1070 = vpop.permute.xlu0 %1069
      %1071 = vrot.lane.b32.xlu0 %v705, 80
      %v1072 = vpop.permute.xlu0 %1071
      %1073 = vrot.lane.b32.xlu0 %v707, 80
      %v1074 = vpop.permute.xlu0 %1073
      %1075 = vrot.lane.b32.xlu0 %v710, 80
      %v1076 = vpop.permute.xlu0 %1075
      %1077 = vrot.lane.b32.xlu0 %v712, 80
      %v1078 = vpop.permute.xlu0 %1077
      %1079 = vrot.lane.b32.xlu0 %v715, 80
      %v1080 = vpop.permute.xlu0 %1079
      %1081 = vrot.lane.b32.xlu0 %v717, 80
      %v1082 = vpop.permute.xlu0 %1081
      %1083 = vrot.lane.b32.xlu0 %v720, 80
      %v1084 = vpop.permute.xlu0 %1083
      %1085 = vrot.lane.b32.xlu0 %v722, 80
      %v1086 = vpop.permute.xlu0 %1085
      %1087 = vrot.lane.b32.xlu0 %v725, 80
      %v1088 = vpop.permute.xlu0 %1087
      %1089 = vrot.lane.b32.xlu0 %v727, 80
      %v1090 = vpop.permute.xlu0 %1089
      %1091 = vrot.lane.b32.xlu0 %v730, 80
      %v1092 = vpop.permute.xlu0 %1091
      %1093 = vrot.lane.b32.xlu0 %v732, 80
      %v1094 = vpop.permute.xlu0 %1093
      %1095 = vrot.lane.b32.xlu0 %v735, 80
      %v1096 = vpop.permute.xlu0 %1095
      %1097 = vrot.lane.b32.xlu0 %v737, 80
      %v1098 = vpop.permute.xlu0 %1097
      %1099 = vrot.lane.b32.xlu0 %v1036, 80
      %v1100 = vpop.permute.xlu0 %1099
      %1101 = vrot.lane.b32.xlu0 %v1038, 80
      %v1102 = vpop.permute.xlu0 %1101
      %1137 = vrot.lane.b32.xlu0 %v384, 96
      %v1138 = vpop.permute.xlu0 %1137
      %1139 = vrot.lane.b32.xlu0 %v385, 96
      %v1140 = vpop.permute.xlu0 %1139
      %1141 = vrot.lane.b32.xlu0 %v387, 96
      %v1142 = vpop.permute.xlu0 %1141
      %1143 = vrot.lane.b32.xlu0 %v388, 96
      %v1144 = vpop.permute.xlu0 %1143
      %1145 = vrot.lane.b32.xlu0 %v390, 96
      %v1146 = vpop.permute.xlu0 %1145
      %1147 = vrot.lane.b32.xlu0 %v391, 96
      %v1148 = vpop.permute.xlu0 %1147
      %1149 = vrot.lane.b32.xlu0 %v393, 96
      %v1150 = vpop.permute.xlu0 %1149
      %1151 = vrot.lane.b32.xlu0 %v394, 96
      %v1152 = vpop.permute.xlu0 %1151
      %1153 = vrot.lane.b32.xlu0 %v396, 96
      %v1154 = vpop.permute.xlu0 %1153
      %1155 = vrot.lane.b32.xlu0 %v397, 96
      %v1156 = vpop.permute.xlu0 %1155
      %1157 = vrot.lane.b32.xlu0 %v399, 96
      %v1158 = vpop.permute.xlu0 %1157
      %1159 = vrot.lane.b32.xlu0 %v400, 96
      %v1160 = vpop.permute.xlu0 %1159
      %1161 = vrot.lane.b32.xlu0 %v402, 96
      %v1162 = vpop.permute.xlu0 %1161
      %1163 = vrot.lane.b32.xlu0 %v403, 96
      %v1164 = vpop.permute.xlu0 %1163
      %1165 = vrot.lane.b32.xlu0 %v405, 96
      %v1166 = vpop.permute.xlu0 %1165
      %1167 = vrot.lane.b32.xlu0 %v406, 96
      %v1168 = vpop.permute.xlu0 %1167
      %1169 = vrot.lane.b32.xlu0 %v408, 96
      %v1170 = vpop.permute.xlu0 %1169
      %1171 = vrot.lane.b32.xlu0 %v409, 96
      %v1172 = vpop.permute.xlu0 %1171
      %1173 = vrot.lane.b32.xlu0 %v411, 96
      %v1174 = vpop.permute.xlu0 %1173
      %1175 = vrot.lane.b32.xlu0 %v412, 96
      %v1176 = vpop.permute.xlu0 %1175
      %1177 = vrot.lane.b32.xlu0 %v414, 96
      %v1178 = vpop.permute.xlu0 %1177
      %1179 = vrot.lane.b32.xlu0 %v415, 96
      %v1180 = vpop.permute.xlu0 %1179
      %1181 = vrot.lane.b32.xlu0 %v417, 96
      %v1182 = vpop.permute.xlu0 %1181
      %1183 = vrot.lane.b32.xlu0 %v418, 96
      %v1184 = vpop.permute.xlu0 %1183
      %1185 = vrot.lane.b32.xlu0 %v420, 96
      %v1186 = vpop.permute.xlu0 %1185
      %1187 = vrot.lane.b32.xlu0 %v421, 96
      %v1188 = vpop.permute.xlu0 %1187
      %1189 = vrot.lane.b32.xlu0 %v423, 96
      %v1190 = vpop.permute.xlu0 %1189
      %1191 = vrot.lane.b32.xlu0 %v424, 96
      %v1192 = vpop.permute.xlu0 %1191
      %1193 = vrot.lane.b32.xlu0 %v426, 96
      %v1194 = vpop.permute.xlu0 %1193
      %1195 = vrot.lane.b32.xlu0 %v427, 96
      %v1196 = vpop.permute.xlu0 %1195
      %1197 = vrot.lane.b32.xlu0 %v429, 96
      %v1198 = vpop.permute.xlu0 %1197
      %1199 = vrot.lane.b32.xlu0 %v430, 96
      %v1200 = vpop.permute.xlu0 %1199
      %v1234 = vrot.slane %v429, 1
      %v1235 = vrot.slane %v430, 1
      %v1236 = vsel %vm480, %v1234, %v1235
      %v1237 = vrot.slane %v431, 1
      %v1238 = vsel %vm480, %v1235, %v1237
      %1239 = vrot.lane.b32.xlu0 %v493, 112
      %v1240 = vpop.permute.xlu0 %1239
      %1241 = vrot.lane.b32.xlu0 %v495, 112
      %v1242 = vpop.permute.xlu0 %1241
      %1243 = vrot.lane.b32.xlu0 %v498, 112
      %v1244 = vpop.permute.xlu0 %1243
      %1245 = vrot.lane.b32.xlu0 %v500, 112
      %v1246 = vpop.permute.xlu0 %1245
      %1247 = vrot.lane.b32.xlu0 %v503, 112
      %v1248 = vpop.permute.xlu0 %1247
      %1249 = vrot.lane.b32.xlu0 %v505, 112
      %v1250 = vpop.permute.xlu0 %1249
      %1251 = vrot.lane.b32.xlu0 %v508, 112
      %v1252 = vpop.permute.xlu0 %1251
      %1253 = vrot.lane.b32.xlu0 %v510, 112
      %v1254 = vpop.permute.xlu0 %1253
      %1255 = vrot.lane.b32.xlu0 %v513, 112
      %v1256 = vpop.permute.xlu0 %1255
      %1257 = vrot.lane.b32.xlu0 %v515, 112
      %v1258 = vpop.permute.xlu0 %1257
      %1259 = vrot.lane.b32.xlu0 %v518, 112
      %v1260 = vpop.permute.xlu0 %1259
      %1261 = vrot.lane.b32.xlu0 %v520, 112
      %v1262 = vpop.permute.xlu0 %1261
      %1263 = vrot.lane.b32.xlu0 %v523, 112
      %v1264 = vpop.permute.xlu0 %1263
      %1265 = vrot.lane.b32.xlu0 %v525, 112
      %v1266 = vpop.permute.xlu0 %1265
      %1267 = vrot.lane.b32.xlu0 %v528, 112
      %v1268 = vpop.permute.xlu0 %1267
      %1269 = vrot.lane.b32.xlu0 %v530, 112
      %v1270 = vpop.permute.xlu0 %1269
      %1271 = vrot.lane.b32.xlu0 %v533, 112
      %v1272 = vpop.permute.xlu0 %1271
      %1273 = vrot.lane.b32.xlu0 %v535, 112
      %v1274 = vpop.permute.xlu0 %1273
      %1275 = vrot.lane.b32.xlu0 %v538, 112
      %v1276 = vpop.permute.xlu0 %1275
      %1277 = vrot.lane.b32.xlu0 %v540, 112
      %v1278 = vpop.permute.xlu0 %1277
      %1279 = vrot.lane.b32.xlu0 %v543, 112
      %v1280 = vpop.permute.xlu0 %1279
      %1281 = vrot.lane.b32.xlu0 %v545, 112
      %v1282 = vpop.permute.xlu0 %1281
      %1283 = vrot.lane.b32.xlu0 %v548, 112
      %v1284 = vpop.permute.xlu0 %1283
      %1285 = vrot.lane.b32.xlu0 %v550, 112
      %v1286 = vpop.permute.xlu0 %1285
      %1287 = vrot.lane.b32.xlu0 %v553, 112
      %v1288 = vpop.permute.xlu0 %1287
      %1289 = vrot.lane.b32.xlu0 %v555, 112
      %v1290 = vpop.permute.xlu0 %1289
      %1291 = vrot.lane.b32.xlu0 %v558, 112
      %v1292 = vpop.permute.xlu0 %1291
      %1293 = vrot.lane.b32.xlu0 %v560, 112
      %v1294 = vpop.permute.xlu0 %1293
      %1295 = vrot.lane.b32.xlu0 %v935, 112
      %v1296 = vpop.permute.xlu0 %1295
      %1297 = vrot.lane.b32.xlu0 %v937, 112
      %v1298 = vpop.permute.xlu0 %1297
      %1299 = vrot.lane.b32.xlu0 %v1236, 112
      %v1300 = vpop.permute.xlu0 %1299
      %1301 = vrot.lane.b32.xlu0 %v1238, 112
      %v1302 = vpop.permute.xlu0 %1301
      %v1335 = vrot.slane %v429, 2
      %v1336 = vrot.slane %v430, 2
      %v1337 = vsel %vm657, %v1335, %v1336
      %v1338 = vrot.slane %v431, 2
      %v1339 = vsel %vm657, %v1336, %v1338
      %vm1372 = vcmask 130048
      %v1373 = vsel %vm1372, %v378, %v562
      %v1374 = vsel %vm1372, %v379, %v564
      %v1375 = vsel %vm1372, %v381, %v566
      %v1376 = vsel %vm1372, %v382, %v568
      %v1377 = vsel %vm1372, %v384, %v570
      %v1378 = vsel %vm1372, %v385, %v572
      %v1379 = vsel %vm1372, %v387, %v574
      %v1380 = vsel %vm1372, %v388, %v576
      %v1381 = vsel %vm1372, %v390, %v578
      %v1382 = vsel %vm1372, %v391, %v580
      %v1383 = vsel %vm1372, %v393, %v582
      %v1384 = vsel %vm1372, %v394, %v584
      %v1385 = vsel %vm1372, %v396, %v586
      %v1386 = vsel %vm1372, %v397, %v588
      %v1387 = vsel %vm1372, %v399, %v590
      %v1388 = vsel %vm1372, %v400, %v592
      %v1389 = vsel %vm1372, %v402, %v594
      %v1390 = vsel %vm1372, %v403, %v596
      %v1391 = vsel %vm1372, %v405, %v598
      %v1392 = vsel %vm1372, %v406, %v600
      %v1393 = vsel %vm1372, %v408, %v602
      %v1394 = vsel %vm1372, %v409, %v604
      %v1395 = vsel %vm1372, %v411, %v606
      %v1396 = vsel %vm1372, %v412, %v608
      %v1397 = vsel %vm1372, %v414, %v610
      %v1398 = vsel %vm1372, %v415, %v612
      %v1399 = vsel %vm1372, %v417, %v614
      %v1400 = vsel %vm1372, %v418, %v616
      %v1401 = vsel %vm1372, %v420, %v618
      %v1402 = vsel %vm1372, %v421, %v620
      %v1403 = vsel %vm1372, %v423, %v622
      %v1404 = vsel %vm1372, %v424, %v624
      %vm1405 = vcmask 261120
      %v1406 = vsel %vm1405, %v1373, %v739
      %v1407 = vsel %vm1405, %v1374, %v741
      %v1408 = vsel %vm1405, %v1375, %v743
      %v1409 = vsel %vm1405, %v1376, %v745
      %v1410 = vsel %vm1405, %v1377, %v747
      %v1411 = vsel %vm1405, %v1378, %v749
      %v1412 = vsel %vm1405, %v1379, %v751
      %v1413 = vsel %vm1405, %v1380, %v753
      %v1414 = vsel %vm1405, %v1381, %v755
      %v1415 = vsel %vm1405, %v1382, %v757
      %v1416 = vsel %vm1405, %v1383, %v759
      %v1417 = vsel %vm1405, %v1384, %v761
      %v1418 = vsel %vm1405, %v1385, %v763
      %v1419 = vsel %vm1405, %v1386, %v765
      %v1420 = vsel %vm1405, %v1387, %v767
      %v1421 = vsel %vm1405, %v1388, %v769
      %v1422 = vsel %vm1405, %v1389, %v771
      %v1423 = vsel %vm1405, %v1390, %v773
      %v1424 = vsel %vm1405, %v1391, %v775
      %v1425 = vsel %vm1405, %v1392, %v777
      %v1426 = vsel %vm1405, %v1393, %v779
      %v1427 = vsel %vm1405, %v1394, %v781
      %v1428 = vsel %vm1405, %v1395, %v783
      %v1429 = vsel %vm1405, %v1396, %v785
      %v1430 = vsel %vm1405, %v1397, %v787
      %v1431 = vsel %vm1405, %v1398, %v789
      %v1432 = vsel %vm1405, %v1399, %v791
      %v1433 = vsel %vm1405, %v1400, %v793
      %v1434 = vsel %vm1405, %v1401, %v795
      %v1435 = vsel %vm1405, %v1402, %v797
      %v1436 = vsel %vm1405, %v1403, %v799
      %v1437 = vsel %vm1405, %v1404, %v801
      %vm1438 = vcmask 392192
      %v1439 = vsel %vm1438, %v1406, %v837
      %v1440 = vsel %vm1438, %v1407, %v839
      %v1441 = vsel %vm1438, %v1408, %v841
      %v1442 = vsel %vm1438, %v1409, %v843
      %v1443 = vsel %vm1438, %v1410, %v845
      %v1444 = vsel %vm1438, %v1411, %v847
      %v1445 = vsel %vm1438, %v1412, %v849
      %v1446 = vsel %vm1438, %v1413, %v851
      %v1447 = vsel %vm1438, %v1414, %v853
      %v1448 = vsel %vm1438, %v1415, %v855
      %v1449 = vsel %vm1438, %v1416, %v857
      %v1450 = vsel %vm1438, %v1417, %v859
      %v1451 = vsel %vm1438, %v1418, %v861
      %v1452 = vsel %vm1438, %v1419, %v863
      %v1453 = vsel %vm1438, %v1420, %v865
      %v1454 = vsel %vm1438, %v1421, %v867
      %v1455 = vsel %vm1438, %v1422, %v869
      %v1456 = vsel %vm1438, %v1423, %v871
      %v1457 = vsel %vm1438, %v1424, %v873
      %v1458 = vsel %vm1438, %v1425, %v875
      %v1459 = vsel %vm1438, %v1426, %v877
      %v1460 = vsel %vm1438, %v1427, %v879
      %v1461 = vsel %vm1438, %v1428, %v881
      %v1462 = vsel %vm1438, %v1429, %v883
      %v1463 = vsel %vm1438, %v1430, %v885
      %v1464 = vsel %vm1438, %v1431, %v887
      %v1465 = vsel %vm1438, %v1432, %v889
      %v1466 = vsel %vm1438, %v1433, %v891
      %v1467 = vsel %vm1438, %v1434, %v893
      %v1468 = vsel %vm1438, %v1435, %v895
      %v1469 = vsel %vm1438, %v1436, %v897
      %v1470 = vsel %vm1438, %v1437, %v899
      %vm1471 = vcmask 523264
      %v1472 = vsel %vm1471, %v1439, %v939
      %v1473 = vsel %vm1471, %v1440, %v941
      %v1474 = vsel %vm1471, %v1441, %v943
      %v1475 = vsel %vm1471, %v1442, %v945
      %v1476 = vsel %vm1471, %v1443, %v947
      %v1477 = vsel %vm1471, %v1444, %v949
      %v1478 = vsel %vm1471, %v1445, %v951
      %v1479 = vsel %vm1471, %v1446, %v953
      %v1480 = vsel %vm1471, %v1447, %v955
      %v1481 = vsel %vm1471, %v1448, %v957
      %v1482 = vsel %vm1471, %v1449, %v959
      %v1483 = vsel %vm1471, %v1450, %v961
      %v1484 = vsel %vm1471, %v1451, %v963
      %v1485 = vsel %vm1471, %v1452, %v965
      %v1486 = vsel %vm1471, %v1453, %v967
      %v1487 = vsel %vm1471, %v1454, %v969
      %v1488 = vsel %vm1471, %v1455, %v971
      %v1489 = vsel %vm1471, %v1456, %v973
      %v1490 = vsel %vm1471, %v1457, %v975
      %v1491 = vsel %vm1471, %v1458, %v977
      %v1492 = vsel %vm1471, %v1459, %v979
      %v1493 = vsel %vm1471, %v1460, %v981
      %v1494 = vsel %vm1471, %v1461, %v983
      %v1495 = vsel %vm1471, %v1462, %v985
      %v1496 = vsel %vm1471, %v1463, %v987
      %v1497 = vsel %vm1471, %v1464, %v989
      %v1498 = vsel %vm1471, %v1465, %v991
      %v1499 = vsel %vm1471, %v1466, %v993
      %v1500 = vsel %vm1471, %v1467, %v995
      %v1501 = vsel %vm1471, %v1468, %v997
      %v1502 = vsel %vm1471, %v1469, %v999
      %v1503 = vsel %vm1471, %v1470, %v1001
      %vm1504 = vcmask 654336
      %v1505 = vsel %vm1504, %v1472, %v1040
      %v1506 = vsel %vm1504, %v1473, %v1042
      %v1507 = vsel %vm1504, %v1474, %v1044
      %v1508 = vsel %vm1504, %v1475, %v1046
      %v1509 = vsel %vm1504, %v1476, %v1048
      %v1510 = vsel %vm1504, %v1477, %v1050
      %v1511 = vsel %vm1504, %v1478, %v1052
      %v1512 = vsel %vm1504, %v1479, %v1054
      %v1513 = vsel %vm1504, %v1480, %v1056
      %v1514 = vsel %vm1504, %v1481, %v1058
      %v1515 = vsel %vm1504, %v1482, %v1060
      %v1516 = vsel %vm1504, %v1483, %v1062
      %v1517 = vsel %vm1504, %v1484, %v1064
      %v1518 = vsel %vm1504, %v1485, %v1066
      %v1519 = vsel %vm1504, %v1486, %v1068
      %v1520 = vsel %vm1504, %v1487, %v1070
      %v1521 = vsel %vm1504, %v1488, %v1072
      %v1522 = vsel %vm1504, %v1489, %v1074
      %v1523 = vsel %vm1504, %v1490, %v1076
      %v1524 = vsel %vm1504, %v1491, %v1078
      %v1525 = vsel %vm1504, %v1492, %v1080
      %v1526 = vsel %vm1504, %v1493, %v1082
      %v1527 = vsel %vm1504, %v1494, %v1084
      %v1528 = vsel %vm1504, %v1495, %v1086
      %v1529 = vsel %vm1504, %v1496, %v1088
      %v1530 = vsel %vm1504, %v1497, %v1090
      %v1531 = vsel %vm1504, %v1498, %v1092
      %v1532 = vsel %vm1504, %v1499, %v1094
      %v1533 = vsel %vm1504, %v1500, %v1096
      %v1534 = vsel %vm1504, %v1501, %v1098
      %v1535 = vsel %vm1504, %v1502, %v1100
      %v1536 = vsel %vm1504, %v1503, %v1102
      %vm1537 = vcmask 785408
      %v1538 = vsel %vm1537, %v1505, %v1138
      %v1539 = vsel %vm1537, %v1506, %v1140
      %v1540 = vsel %vm1537, %v1507, %v1142
      %v1541 = vsel %vm1537, %v1508, %v1144
      %v1542 = vsel %vm1537, %v1509, %v1146
      %v1543 = vsel %vm1537, %v1510, %v1148
      %v1544 = vsel %vm1537, %v1511, %v1150
      %v1545 = vsel %vm1537, %v1512, %v1152
      %v1546 = vsel %vm1537, %v1513, %v1154
      %v1547 = vsel %vm1537, %v1514, %v1156
      %v1548 = vsel %vm1537, %v1515, %v1158
      %v1549 = vsel %vm1537, %v1516, %v1160
      %v1550 = vsel %vm1537, %v1517, %v1162
      %v1551 = vsel %vm1537, %v1518, %v1164
      %v1552 = vsel %vm1537, %v1519, %v1166
      %v1553 = vsel %vm1537, %v1520, %v1168
      %v1554 = vsel %vm1537, %v1521, %v1170
      %v1555 = vsel %vm1537, %v1522, %v1172
      %v1556 = vsel %vm1537, %v1523, %v1174
      %v1557 = vsel %vm1537, %v1524, %v1176
      %v1558 = vsel %vm1537, %v1525, %v1178
      %v1559 = vsel %vm1537, %v1526, %v1180
      %v1560 = vsel %vm1537, %v1527, %v1182
      %v1561 = vsel %vm1537, %v1528, %v1184
      %v1562 = vsel %vm1537, %v1529, %v1186
      %v1563 = vsel %vm1537, %v1530, %v1188
      %v1564 = vsel %vm1537, %v1531, %v1190
      %v1565 = vsel %vm1537, %v1532, %v1192
      %v1566 = vsel %vm1537, %v1533, %v1194
      %v1567 = vsel %vm1537, %v1534, %v1196
      %v1568 = vsel %vm1537, %v1535, %v1198
      %v1569 = vsel %vm1537, %v1536, %v1200
      %vm1570 = vcmask 916480
      %v1571 = vsel %vm1570, %v1538, %v1240
      %v1572 = vsel %vm1570, %v1539, %v1242
      %v1573 = vsel %vm1570, %v1540, %v1244
      %v1574 = vsel %vm1570, %v1541, %v1246
      %v1575 = vsel %vm1570, %v1542, %v1248
      %v1576 = vsel %vm1570, %v1543, %v1250
      %v1577 = vsel %vm1570, %v1544, %v1252
      %v1578 = vsel %vm1570, %v1545, %v1254
      %v1579 = vsel %vm1570, %v1546, %v1256
      %v1580 = vsel %vm1570, %v1547, %v1258
      %v1581 = vsel %vm1570, %v1548, %v1260
      %v1582 = vsel %vm1570, %v1549, %v1262
      %v1583 = vsel %vm1570, %v1550, %v1264
      %v1584 = vsel %vm1570, %v1551, %v1266
      %v1585 = vsel %vm1570, %v1552, %v1268
      %v1586 = vsel %vm1570, %v1553, %v1270
      %v1587 = vsel %vm1570, %v1554, %v1272
      %v1588 = vsel %vm1570, %v1555, %v1274
      %v1589 = vsel %vm1570, %v1556, %v1276
      %v1590 = vsel %vm1570, %v1557, %v1278
      %v1591 = vsel %vm1570, %v1558, %v1280
      %v1592 = vsel %vm1570, %v1559, %v1282
      %v1593 = vsel %vm1570, %v1560, %v1284
      %v1594 = vsel %vm1570, %v1561, %v1286
      %v1595 = vsel %vm1570, %v1562, %v1288
      %v1596 = vsel %vm1570, %v1563, %v1290
      %v1597 = vsel %vm1570, %v1564, %v1292
      %v1598 = vsel %vm1570, %v1565, %v1294
      %v1599 = vsel %vm1570, %v1566, %v1296
      %v1600 = vsel %vm1570, %v1567, %v1298
      %v1601 = vsel %vm1570, %v1568, %v1300
      %v1602 = vsel %vm1570, %v1569, %v1302
      %v1603 = vpack.c.bf16 %v1572, %v1571
      %v1604 = vpack.c.bf16 %v672, %v670
      %v1605 = vpack.c.bf16 %v1574, %v1573
      %v1606 = vpack.c.bf16 %v677, %v675
      %v1607 = vpack.c.bf16 %v1576, %v1575
      %v1608 = vpack.c.bf16 %v682, %v680
      %v1609 = vpack.c.bf16 %v1578, %v1577
      %v1610 = vpack.c.bf16 %v687, %v685
      %v1611 = vpack.c.bf16 %v1580, %v1579
      %v1612 = vpack.c.bf16 %v692, %v690
      %v1613 = vpack.c.bf16 %v1582, %v1581
      %v1614 = vpack.c.bf16 %v697, %v695
      %v1615 = vpack.c.bf16 %v1584, %v1583
      %v1616 = vpack.c.bf16 %v702, %v700
      %v1617 = vpack.c.bf16 %v1586, %v1585
      %v1618 = vpack.c.bf16 %v707, %v705
      %v1619 = vpack.c.bf16 %v1588, %v1587
      %v1620 = vpack.c.bf16 %v712, %v710
      %v1621 = vpack.c.bf16 %v1590, %v1589
      %v1622 = vpack.c.bf16 %v717, %v715
      %v1623 = vpack.c.bf16 %v1592, %v1591
      %v1624 = vpack.c.bf16 %v722, %v720
      %v1625 = vpack.c.bf16 %v1594, %v1593
      %v1626 = vpack.c.bf16 %v727, %v725
      %v1627 = vpack.c.bf16 %v1596, %v1595
      %v1628 = vpack.c.bf16 %v732, %v730
      %v1629 = vpack.c.bf16 %v1598, %v1597
      %v1630 = vpack.c.bf16 %v737, %v735
      %v1631 = vpack.c.bf16 %v1600, %v1599
      %v1632 = vpack.c.bf16 %v1038, %v1036
      %v1633 = vpack.c.bf16 %v1602, %v1601
      %v1634 = vpack.c.bf16 %v1339, %v1337
      %v1635 = vld [vmem:[%s1] sm:$0xff]
      %v1636 = vld [vmem:[%s1 + $0x8] sm:$0xff]
      %v1637 = vld [vmem:[%s1 + $0x10] sm:$0xff]
      %v1638 = vld [vmem:[%s1 + $0x18] sm:$0xff]
      %v1643 = vunpack.c.l.b16 %v1635
      %v1644 = vunpack.c.h.b16 %v1635
      %v1645 = vunpack.c.l.b16 %v1636
      %v1646 = vunpack.c.h.b16 %v1636
      %v1647 = vunpack.c.l.b16 %v1637
      %v1648 = vunpack.c.h.b16 %v1637
      %v1649 = vunpack.c.l.b16 %v1638
      %v1650 = vunpack.c.h.b16 %v1638
      %v1651 = vpack.c.b16 %v1645, %v1643
      %v1652 = vpack.c.b16 %v1646, %v1644
      %v1653 = vpack.c.b16 %v1649, %v1647
      %v1654 = vpack.c.b16 %v1650, %v1648
      %v1658 = vsel %vm1372, %v1652, 0
      %v1661 = vsel %vm1372, %v1654, 0
      %v1664 = vsel %vm1372, %v1604, 0
      %v1667 = vsel %vm1372, %v1606, 0
      %v1670 = vsel %vm1372, %v1608, 0
      %v1673 = vsel %vm1372, %v1610, 0
      %v1676 = vsel %vm1372, %v1612, 0
      %v1679 = vsel %vm1372, %v1614, 0
      %v1682 = vsel %vm1372, %v1616, 0
      %v1685 = vsel %vm1372, %v1618, 0
      %v1688 = vsel %vm1372, %v1620, 0
      %v1691 = vsel %vm1372, %v1622, 0
      %v1694 = vsel %vm1372, %v1624, 0
      %v1697 = vsel %vm1372, %v1626, 0
      %v1700 = vsel %vm1372, %v1628, 0
      %v1703 = vsel %vm1372, %v1630, 0
      %v1706 = vsel %vm1372, %v1632, 0
      %v1709 = vsel %vm1372, %v1634, 0
      %1711 = vmatprep.subr.bf16.mxu0 %v1685
      %1712 = vmatpush1.bf16.xpose.msra.mxu0 %v1617
      %1713 = vmatprep.subr.bf16.mxu0 %v1682
      %1714 = vmatpush1.bf16.xpose.msra.mxu0 %v1615
      %1715 = vmatprep.subr.bf16.mxu0 %v1679
      %1716 = vmatpush1.bf16.xpose.msra.mxu0 %v1613
      %1717 = vmatprep.subr.bf16.mxu0 %v1676
      %1718 = vmatpush1.bf16.xpose.msra.mxu0 %v1611
      %1719 = vmatprep.subr.bf16.mxu0 %v1673
      %1720 = vmatpush1.bf16.xpose.msra.mxu0 %v1609
      %1721 = vmatprep.subr.bf16.mxu0 %v1670
      %1722 = vmatpush1.bf16.xpose.msra.mxu0 %v1607
      %1723 = vmatprep.subr.bf16.mxu0 %v1667
      %1724 = vmatpush1.bf16.xpose.msra.mxu0 %v1605
      %1725 = vmatprep.subr.bf16.mxu0 %v1664
      %1726 = vmatpush1.bf16.xpose.msra.mxu0 %v1603
      %1727 = vmatprep.subr.bf16.mxu0 %v1709
      %1728 = vmatpush2.bf16.xpose.msra.mxu0 %v1633
      %1729 = vmatprep.subr.bf16.mxu0 %v1706
      %1730 = vmatpush2.bf16.xpose.msra.mxu0 %v1631
      %1731 = vmatprep.subr.bf16.mxu0 %v1703
      %1732 = vmatpush2.bf16.xpose.msra.mxu0 %v1629
      %1733 = vmatprep.subr.bf16.mxu0 %v1700
      %1734 = vmatpush2.bf16.xpose.msra.mxu0 %v1627
      %1735 = vmatprep.subr.bf16.mxu0 %v1697
      %1736 = vmatpush2.bf16.xpose.msra.mxu0 %v1625
      %1737 = vmatprep.subr.bf16.mxu0 %v1694
      %1738 = vmatpush2.bf16.xpose.msra.mxu0 %v1623
      %1739 = vmatprep.subr.bf16.mxu0 %v1691
      %1740 = vmatpush2.bf16.xpose.msra.mxu0 %v1621
      %1741 = vmatprep.subr.bf16.mxu0 %v1688
      %1742 = vmatpush2.bf16.xpose.msra.mxu0 %v1619
      %1743 = vmatprep.mubr.bf16.mxu0 %v1658
      %1744 = vmatmul.mubr.bf16.gmra.mxu0 %v1651
      %v1745 = vpop.f32.mrf.mxu0
      %v1746 = vadd.f32 0.0, %v1745
      %v1747 = vpop.f32.mrf.mxu0
      %v1748 = vadd.f32 0.0, %v1747
      %v1749 = vpop.f32.mrf.mxu0
      %v1750 = vadd.f32 0.0, %v1749
      %v1751 = vpop.f32.mrf.mxu0
      %v1752 = vadd.f32 0.0, %v1751
      %1753 = vmatprep.mubr.bf16.mxu0 %v1661
      %1754 = vmatmul.mubr.bf16.gmra.mxu0 %v1653
      %v1755 = vpop.f32.mrf.mxu0
      %v1756 = vadd.f32 0.0, %v1755
      %v1757 = vpop.f32.mrf.mxu0
      %v1758 = vadd.f32 0.0, %v1757
      %v1759 = vpop.f32.mrf.mxu0
      %v1760 = vadd.f32 0.0, %v1759
      %v1761 = vpop.f32.mrf.mxu0
      %v1762 = vadd.f32 0.0, %v1761
      %1763 = vdwg.mxu0
      %v1764 = vpack.c.bf16 %v1750, %v1746
      %v1765 = vpack.c.bf16 %v1752, %v1748
      %v1766 = vpack.c.bf16 %v1760, %v1756
      %v1767 = vpack.c.bf16 %v1762, %v1758
      %v1772 = vunpack.c.l.b16 %v1764
      %v1773 = vunpack.c.l.b16 %v1765
      %v1774 = vunpack.c.h.b16 %v1764
      %v1775 = vunpack.c.h.b16 %v1765
      %v1776 = vunpack.c.l.b16 %v1766
      %v1777 = vunpack.c.l.b16 %v1767
      %v1778 = vunpack.c.h.b16 %v1766
      %v1779 = vunpack.c.h.b16 %v1767
      %v1780 = vpack.c.b16 %v1773, %v1772
      %v1781 = vpack.c.b16 %v1775, %v1774
      %v1782 = vpack.c.b16 %v1777, %v1776
      %v1783 = vpack.c.b16 %v1779, %v1778
      %1788 = vst [vmem:[%s246] sm:$0xff] %v1780
      %1789 = vst [vmem:[%s246 + $0x8] sm:$0xff] %v1781
      %1790 = vst [vmem:[%s246 + $0x10] sm:$0xff] %v1782
      %1791 = vst [vmem:[%s246 + $0x18] sm:$0xff] %v1783
      %v1792 = vadd.f32 %v1746, %v1748
      %1793 = vadd.xlane.f32.xlu0 %v1792
      %v1794 = vpop.xlane.xlu0 %1793
      %v1795 = vadd.f32 %v1750, %v1752
      %1796 = vadd.xlane.f32.xlu0 %v1795
      %v1797 = vpop.xlane.xlu0 %1796
      %v1798 = vadd.f32 %v1756, %v1758
      %1799 = vadd.xlane.f32.xlu0 %v1798
      %v1800 = vpop.xlane.xlu0 %1799
      %v1801 = vadd.f32 %v1760, %v1762
      %1802 = vadd.xlane.f32.xlu0 %v1801
      %v1803 = vpop.xlane.xlu0 %1802
      %vm1804 = vcmask 7168
      %1805 = vst.msk [vmem:[%s256] sm:$0xff] %vm1804, %v1794
      %1806 = vst.msk [vmem:[%s256 + $0x8] sm:$0xff] %vm1804, %v1797
      %1807 = vst.msk [vmem:[%s256 + $0x10] sm:$0xff] %vm1804, %v1800
      %1808 = vst.msk [vmem:[%s256 + $0x18] sm:$0xff] %vm1804, %v1803
      %v1809 = vmul.f32 %v1746, %v1746
      %v1810 = vmul.f32 %v1748, %v1748
      %v1811 = vmul.f32 %v1750, %v1750
      %v1812 = vmul.f32 %v1752, %v1752
      %v1813 = vmul.f32 %v1756, %v1756
      %v1814 = vmul.f32 %v1758, %v1758
      %v1815 = vmul.f32 %v1760, %v1760
      %v1816 = vmul.f32 %v1762, %v1762
      %v1817 = vadd.f32 %v1809, %v1810
      %1818 = vadd.xlane.f32.xlu0 %v1817
      %v1819 = vpop.xlane.xlu0 %1818
      %v1820 = vadd.f32 %v1811, %v1812
      %1821 = vadd.xlane.f32.xlu0 %v1820
      %v1822 = vpop.xlane.xlu0 %1821
      %v1823 = vadd.f32 %v1813, %v1814
      %1824 = vadd.xlane.f32.xlu0 %v1823
      %v1825 = vpop.xlane.xlu0 %1824
      %v1826 = vadd.f32 %v1815, %v1816
      %1827 = vadd.xlane.f32.xlu0 %v1826
      %v1828 = vpop.xlane.xlu0 %1827
      %1829 = vst.msk [vmem:[%s265] sm:$0xff] %vm1804, %v1819
      %1830 = vst.msk [vmem:[%s265 + $0x8] sm:$0xff] %vm1804, %v1822
      %1831 = vst.msk [vmem:[%s265 + $0x10] sm:$0xff] %vm1804, %v1825
      %1832 = vst.msk [vmem:[%s265 + $0x18] sm:$0xff] %vm1804, %v1828
      %s1833 = smul.u32 2, %s21
      %p1834 = scmp.lt.s32.totalorder %s20, 3
      %s1835 = scalar_select %p1834, %s20, 3
      %p1836 = scmp.lt.s32.totalorder %s1833, 1
      %s1837 = scalar_select %p1836, %s1833, 1
      %s1838 = smul.addr %s1835, 8
      %s1839 = sadd.s32 %s1837, %s1838
      %s1840 = smul.addr %s1839, 4
      %s1841 = scalar_lea.vmem %s2, %s1840
      %p1842 = scmp.lt.s32.totalorder %s20, 3
      %s1843 = scalar_select %p1842, %s20, 3
      %p1844 = scmp.lt.s32.totalorder %s21, 0
      %s1845 = scalar_select %p1844, %s21, 0
      %s1846 = smul.addr %s1845, 4
      %s1847 = smul.addr %s1843, 4
      %s1848 = sadd.s32 %s1846, %s1847
      %s1849 = smul.addr %s1848, 8
      %s1850 = scalar_lea.vmem %s3, %s1849
      %p1851 = scmp.lt.s32.totalorder %s20, 3
      %s1852 = scalar_select %p1851, %s20, 3
      %p1853 = scmp.lt.s32.totalorder %s21, 0
      %s1854 = scalar_select %p1853, %s21, 0
      %s1855 = smul.addr %s1854, 4
      %s1856 = smul.addr %s1852, 4
      %s1857 = sadd.s32 %s1855, %s1856
      %s1858 = smul.addr %s1857, 8
      %s1859 = scalar_lea.vmem %s4, %s1858
      // Predicated region
      $region29: #{stdconv_forward.2} parent=27 // pred_check
        %p1860 = pneg %p95
      $region30: #{stdconv_forward.2} parent=27 // pred_check_branch
        %1862 = sbr.rel (%p1860) target = $region32
      $region31: #{stdconv_forward.2} parent=27 // pred_region
        %s1863 = smul.u32 2, %s21
      $region32: #{stdconv_forward.2} parent=27 // pred_fallthru
        _
      // Predicated region
      $region33: #{stdconv_forward.2} parent=27 // pred_check
        %p1864 = pneg %p123
      $region34: #{stdconv_forward.2} parent=27 // pred_check_branch
        %1866 = sbr.rel (%p1864) target = $region36
      $region35: #{stdconv_forward.2} parent=27 // pred_region
        _
      $region36: #{stdconv_forward.2} parent=27 // pred_fallthru
        _
      // Predicated region
      $region37: #{stdconv_forward.2} parent=27 // pred_check
        %p1867 = pneg %p151
      $region38: #{stdconv_forward.2} parent=27 // pred_check_branch
        %1869 = sbr.rel (%p1867) target = $region40
      $region39: #{stdconv_forward.2} parent=27 // pred_region
        _
      $region40: #{stdconv_forward.2} parent=27 // pred_fallthru
        _
    $region28: #{stdconv_forward.2} parent=5 // pred_fallthru
      _
    %p1870 = scmp.le.s32.totalorder 2, %s11
    // Predicated region
    $region41: #{stdconv_forward.2} parent=5 // pred_check
      %p1871 = pneg %p1870
    $region42: #{stdconv_forward.2} parent=5 // pred_check_branch
      %1873 = sbr.rel (%p1871) target = $region44
    $region43: #{stdconv_forward.2} parent=5 // pred_region
      %s1874 = ssub.s32 %s11, 2
      // Predicated region
      $region45: #{stdconv_forward.2} parent=43 // pred_check
        %p1875 = pneg %p101
      $region46: #{stdconv_forward.2} parent=43 // pred_check_branch
        %1877 = sbr.rel (%p1875) target = $region48
      $region47: #{stdconv_forward.2} parent=43 // pred_region
        %s1878 = smul.u32 2, %s23
        %p1879 = scmp.lt.s32.totalorder %s22, 3
        %s1880 = scalar_select %p1879, %s22, 3
        %p1881 = scmp.lt.s32.totalorder %s1878, 1
        %s1882 = scalar_select %p1881, %s1878, 1
        %s1883 = smul.addr %s1880, 8
        %s1884 = sadd.s32 %s1882, %s1883
        %s1885 = smul.addr %s1884, 4
        %s1886 = scalar_lea.vmem %s2, %s1885
      $region48: #{stdconv_forward.2} parent=43 // pred_fallthru
        _
      // Predicated region
      $region49: #{stdconv_forward.2} parent=43 // pred_check
        %p1887 = pneg %p129
      $region50: #{stdconv_forward.2} parent=43 // pred_check_branch
        %1889 = sbr.rel (%p1887) target = $region52
      $region51: #{stdconv_forward.2} parent=43 // pred_region
        %p1890 = scmp.lt.s32.totalorder %s22, 3
        %s1891 = scalar_select %p1890, %s22, 3
        %p1892 = scmp.lt.s32.totalorder %s23, 0
        %s1893 = scalar_select %p1892, %s23, 0
        %s1894 = smul.addr %s1893, 4
        %s1895 = smul.addr %s1891, 4
        %s1896 = sadd.s32 %s1894, %s1895
        %s1897 = smul.addr %s1896, 8
        %s1898 = scalar_lea.vmem %s3, %s1897
      $region52: #{stdconv_forward.2} parent=43 // pred_fallthru
        _
      // Predicated region
      $region53: #{stdconv_forward.2} parent=43 // pred_check
        %p1899 = pneg %p157
      $region54: #{stdconv_forward.2} parent=43 // pred_check_branch
        %1901 = sbr.rel (%p1899) target = $region56
      $region55: #{stdconv_forward.2} parent=43 // pred_region
        %p1902 = scmp.lt.s32.totalorder %s22, 3
        %s1903 = scalar_select %p1902, %s22, 3
        %p1904 = scmp.lt.s32.totalorder %s23, 0
        %s1905 = scalar_select %p1904, %s23, 0
        %s1906 = smul.addr %s1905, 4
        %s1907 = smul.addr %s1903, 4
        %s1908 = sadd.s32 %s1906, %s1907
        %s1909 = smul.addr %s1908, 8
        %s1910 = scalar_lea.vmem %s4, %s1909
      $region56: #{stdconv_forward.2} parent=43 // pred_fallthru
        _
    $region44: #{stdconv_forward.2} parent=5 // pred_fallthru
      _
  $region6: #{stdconv_forward.2} parent=0 // loop_footer
    %s15 = sadd.s32 1, %s11
  $region7: #{stdconv_forward.2} parent=0 // loop_footer_branch
    %10 = sbr.rel target = $region3
  $region8: #{stdconv_forward.2} parent=0 // loop_exit
    _

</llo_original>
